<compile_context>
chip_gen: v7x
topology: tpu7x:2x2x1
jax: 0.10.0
libtpu: 0.0.40
codegen_flags: <defaults>
</compile_context>

<pallas_src>
import functools
import math

import jax
import jax.numpy as jnp
from jax import lax
from jax.experimental import pallas as pl
from jax.experimental.pallas import tpu as pltpu


# --------------------------------------------------------------------------
# Config (small synthetic student BERT).  stu_hidden == tea_hidden, so the
# module's `flag` is False and the hidn/emb converters are never applied.
# --------------------------------------------------------------------------
class Config:
    stu_vocab_size = 100
    type_vocab_size = 2
    max_position = 16
    stu_hidden_size = 32
    tea_hidden_size = 32
    num_heads = 4
    intermediate_size = 64
    stu_hidden_layers = 2
    class_num = 3
    ln_eps = 1e-12


CFG = Config()
_MASK_VALUE = -10000.0     # HF additive attention-mask value
_LOGIT_PAD = 128           # lane-dense classifier output, sliced to class_num


# --------------------------------------------------------------------------
# In-kernel helpers (f32 math)
# --------------------------------------------------------------------------
def _layernorm(h, gamma, beta, eps):
    mu = jnp.mean(h, axis=-1, keepdims=True)
    var = jnp.mean((h - mu) * (h - mu), axis=-1, keepdims=True)
    return (h - mu) * lax.rsqrt(var + eps) * gamma + beta


def _gelu_tanh(y):
    # TODO(synk): tanh-approx GELU (HF BertModel uses exact erf GELU; the
    # numeric difference is small and avoids relying on erf lowering).
    c = jnp.float32(math.sqrt(2.0 / math.pi))
    return 0.5 * y * (1.0 + jnp.tanh(c * (y + 0.044715 * y * y * y)))


# --------------------------------------------------------------------------
# Single fused kernel: grid step == encoder layer; layer 0 also does the
# embedding LayerNorm + attention-bias build; the last layer also runs the
# pooler + classifier head on the CLS rows of the carried state.
# --------------------------------------------------------------------------
def _fused_kernel(emb_ref, rowc_ref, colc_ref, eg_ref, eb_ref, hm_ref,
                  wqkv_ref, bqkv_ref, wo_ref, bo_ref, g1_ref, b1_ref,
                  wi_ref, bi_ref, wf_ref, bf_ref, g2_ref, b2_ref,
                  pw_ref, pb_ref, fw_ref, fb_ref,
                  x_ref, pooled_ref, logits_ref,
                  bias_scr,
                  *, num_heads, batch, seq, eps):
    layer = pl.program_id(0)

    # Grid step 0: embedding LayerNorm seeds the carried state; the additive
    # attention bias (padding + block-diagonal batch structure) is built once
    # into VMEM scratch from two O(N) code vectors and reused by every layer.
    @pl.when(layer == 0)
    def _():
        x_ref[...] = _layernorm(emb_ref[...], eg_ref[...], eb_ref[...], eps)
        valid = rowc_ref[...] == colc_ref[...]            # (N,1)==(1,N) -> (N,N)
        bias_scr[...] = jnp.where(valid, 0.0, _MASK_VALUE).astype(jnp.float32)
        pooled_ref[...] = jnp.zeros_like(pooled_ref)
        logits_ref[...] = jnp.zeros_like(logits_ref)

    x = x_ref[...]                                        # (N, H) f32, VMEM-resident
    hidden = x.shape[-1]
    xb = x.astype(jnp.bfloat16)

    # ---- fused QKV projection (softmax scale pre-folded into Q weights) ----
    qkv = jnp.dot(xb, wqkv_ref[...],
                  preferred_element_type=jnp.float32) + bqkv_ref[...]
    qb = qkv[:, :hidden].astype(jnp.bfloat16)
    kb = qkv[:, hidden:2 * hidden].astype(jnp.bfloat16)
    vb = qkv[:, 2 * hidden:].astype(jnp.bfloat16)

    # ---- multi-head self-attention on flattened (B*S) rows ----
    # heads are selected by a precomputed bf16 column mask (multiply, no
    # reshapes / transposes / per-head f32 selects inside the kernel).
    bias = bias_scr[...]                                  # (N, N) f32
    hm = hm_ref[...]                                      # (num_heads, H) bf16
    ctx = jnp.zeros_like(x)
    for h in range(num_heads):
        mh = hm[h:h + 1, :]                               # (1, H) bf16 0/1
        qh = qb * mh
        s = lax.dot_general(qh, kb, (((1,), (1,)), ((), ())),
                            preferred_element_type=jnp.float32) + bias
        m = jnp.max(s, axis=-1, keepdims=True)
        p = jnp.exp(s - m)
        p = p * pl.reciprocal(jnp.sum(p, axis=-1, keepdims=True), approx=True)
        ctx = ctx + jnp.dot(p.astype(jnp.bfloat16), vb * mh,
                            preferred_element_type=jnp.float32)

    # ---- output projection + residual + LayerNorm1 ----
    attn = jnp.dot(ctx.astype(jnp.bfloat16), wo_ref[...],
                   preferred_element_type=jnp.float32) + bo_ref[...]
    x1 = _layernorm(attn + x, g1_ref[...], b1_ref[...], eps)

    # ---- fused FFN (intermediate never leaves VMEM/vregs) + LayerNorm2 ----
    inter = jnp.dot(x1.astype(jnp.bfloat16), wi_ref[...],
                    preferred_element_type=jnp.float32) + bi_ref[...]
    inter = _gelu_tanh(inter)
    ff = jnp.dot(inter.astype(jnp.bfloat16), wf_ref[...],
                 preferred_element_type=jnp.float32) + bf_ref[...]
    x_new = _layernorm(ff + x1, g2_ref[...], b2_ref[...], eps)
    x_ref[...] = x_new

    # ---- fused pooler + classifier head on the last grid step ----
    @pl.when(layer == pl.num_programs(0) - 1)
    def _():
        # CLS rows 0, S, 2S, ... taken straight from the in-register state.
        cls = jnp.concatenate(
            [x_new[b * seq:b * seq + 1, :] for b in range(batch)], axis=0)
        pooled = jnp.tanh(
            jnp.dot(cls.astype(jnp.bfloat16), pw_ref[...],
                    preferred_element_type=jnp.float32) + pb_ref[...])
        pooled_ref[...] = pooled
        logits_ref[...] = jnp.dot(pooled.astype(jnp.bfloat16), fw_ref[...],
                                  preferred_element_type=jnp.float32) + fb_ref[...]


def fused_forward(emb, row_code, col_code, params, cfg, batch, seq):
    N, H = emb.shape
    L = cfg.stu_hidden_layers
    I = cfg.intermediate_size
    nh = cfg.num_heads

    def const(shape):
        return pl.BlockSpec(shape, lambda l: (0, 0))

    def per_layer(shape):
        return pl.BlockSpec((None,) + shape, lambda l: (l, 0, 0))

    kernel = functools.partial(_fused_kernel, num_heads=nh,
                               batch=batch, seq=seq, eps=cfg.ln_eps)

    return pl.pallas_call(
        kernel,
        out_shape=(jax.ShapeDtypeStruct((N, H), jnp.float32),          # sequence
                   jax.ShapeDtypeStruct((batch, H), jnp.float32),      # pooled
                   jax.ShapeDtypeStruct((batch, _LOGIT_PAD), jnp.float32)),
        grid=(L,),
        in_specs=[
            const((N, H)),            # embedding sum (pre-LayerNorm)
            const((N, 1)),            # row batch code
            const((1, N)),            # key code: batch id, or -1 if padded
            const((1, H)),            # embedding LN gamma
            const((1, H)),            # embedding LN beta
            const((nh, H)),           # per-head column masks (bf16)
            per_layer((H, 3 * H)),    # wqkv (bf16, scale folded into Q)
            per_layer((1, 3 * H)),    # bqkv
            per_layer((H, H)),        # wo   (bf16)
            per_layer((1, H)),        # bo
            per_layer((1, H)),        # ln1 gamma
            per_layer((1, H)),        # ln1 beta
            per_layer((H, I)),        # wi   (bf16)
            per_layer((1, I)),        # bi
            per_layer((I, H)),        # wf   (bf16)
            per_layer((1, H)),        # bf
            per_layer((1, H)),        # ln2 gamma
            per_layer((1, H)),        # ln2 beta
            const((H, H)),            # pooler weight (bf16)
            const((1, H)),            # pooler bias
            const((H, _LOGIT_PAD)),   # classifier weight (bf16, lane-padded)
            const((1, _LOGIT_PAD)),   # classifier bias
        ],
        out_specs=(pl.BlockSpec((N, H), lambda l: (0, 0)),
                   pl.BlockSpec((batch, H), lambda l: (0, 0)),
                   pl.BlockSpec((batch, _LOGIT_PAD), lambda l: (0, 0))),
        scratch_shapes=[pltpu.VMEM((N, N), jnp.float32)],   # attention bias
        compiler_params=pltpu.CompilerParams(
            dimension_semantics=("arbitrary",)),
    )(emb, row_code, col_code, params["emb_ln_g"], params["emb_ln_b"],
      params["head_mask"],
      params["wqkv"], params["bqkv"], params["wo"], params["bo"],
      params["ln1_g"], params["ln1_b"], params["wi"], params["bi"],
      params["wf"], params["bf"], params["ln2_g"], params["ln2_b"],
      params["pool_w"], params["pool_b"],
      params["fc_w_pad"], params["fc_b_pad"])


# --------------------------------------------------------------------------
# Deterministic synthetic parameters (stand-in for a BertModel checkpoint)
# --------------------------------------------------------------------------
def init_params(cfg, key):
    keys = iter(jax.random.split(key, 16))

    def nrm(shape, std=0.02):
        return (std * jax.random.normal(next(keys), shape)).astype(jnp.float32)

    H, I, L = cfg.stu_hidden_size, cfg.intermediate_size, cfg.stu_hidden_layers
    nh = cfg.num_heads
    hd = H // nh
    scale = 1.0 / math.sqrt(hd)

    # fold the attention softmax scale into the Q columns of the fused QKV
    wqkv = nrm((L, H, 3 * H))
    wqkv = wqkv.at[:, :, :H].multiply(scale)
    bqkv = jnp.zeros((L, 1, 3 * H), jnp.float32)
    bqkv = bqkv.at[:, :, :H].multiply(scale)

    # precomputed per-head 0/1 column masks (bf16 multiplicative, ~256 B)
    col = jnp.arange(H)
    head_mask = jnp.stack(
        [((col >= h * hd) & (col < (h + 1) * hd)).astype(jnp.bfloat16)
         for h in range(nh)], axis=0)                       # (nh, H)

    params = {
        "word_emb": nrm((cfg.stu_vocab_size, H)),
        "pos_emb": nrm((cfg.max_position, H)),
        "type_emb": nrm((cfg.type_vocab_size, H)),
        "emb_ln_g": jnp.ones((1, H), jnp.float32),
        "emb_ln_b": jnp.zeros((1, H), jnp.float32),
        "head_mask": head_mask,
        # per-layer encoder weights stacked on a leading layer axis;
        # matmul operands stored in bf16 (MXU-native), biases/LN in f32.
        "wqkv": wqkv.astype(jnp.bfloat16),
        "bqkv": bqkv,
        "wo": nrm((L, H, H)).astype(jnp.bfloat16),
        "bo": jnp.zeros((L, 1, H), jnp.float32),
        "ln1_g": jnp.ones((L, 1, H), jnp.float32),
        "ln1_b": jnp.zeros((L, 1, H), jnp.float32),
        "wi": nrm((L, H, I)).astype(jnp.bfloat16),
        "bi": jnp.zeros((L, 1, I), jnp.float32),
        "wf": nrm((L, I, H)).astype(jnp.bfloat16),
        "bf": jnp.zeros((L, 1, H), jnp.float32),
        "ln2_g": jnp.ones((L, 1, H), jnp.float32),
        "ln2_b": jnp.zeros((L, 1, H), jnp.float32),
        "pool_w": nrm((H, H)).astype(jnp.bfloat16),
        "pool_b": jnp.zeros((1, H), jnp.float32),
    }
    # classifier head, lane-padded to 128 output columns (sliced in wrapper)
    fc_w = nrm((H, cfg.class_num))
    params["fc_w_pad"] = (jnp.zeros((H, _LOGIT_PAD), jnp.bfloat16)
                          .at[:, :cfg.class_num].set(fc_w.astype(jnp.bfloat16)))
    params["fc_b_pad"] = jnp.zeros((1, _LOGIT_PAD), jnp.float32)
    return params


# --------------------------------------------------------------------------
# Forward pass  (== student_bert_classfier.forward(text, token, mask))
# --------------------------------------------------------------------------
def student_bert_classifier_forward(params, text, token, mask, cfg=CFG):
    input_ids, attention_mask, token_type_ids = text, token, mask
    B, S = input_ids.shape
    H = cfg.stu_hidden_size
    N = B * S

    # TODO(synk): the three embedding gathers stay as plain-JAX glue (dynamic
    # row gather has no clean Pallas equivalent worth the risk at this scale);
    # everything downstream (LN, 2 encoder layers, pooler, classifier) is one
    # fused pallas_call.
    pos_ids = jnp.arange(S, dtype=jnp.int32)
    emb = (params["word_emb"][input_ids]
           + params["pos_emb"][pos_ids][None, :, :]
           + params["type_emb"][token_type_ids])
    emb = emb.reshape(N, H).astype(jnp.float32)

    # O(N) batch/padding codes; the (N,N) additive bias is built in-kernel.
    batch_ids = jnp.repeat(jnp.arange(B, dtype=jnp.float32), S)   # (N,)
    key_ok = attention_mask.reshape(N) > 0
    row_code = batch_ids.reshape(N, 1)
    col_code = jnp.where(key_ok, batch_ids, -1.0).reshape(1, N)

    x, pooled, logits_pad = fused_forward(emb, row_code, col_code,
                                          params, cfg, B, S)
    sequence_output = x.reshape(B, S, H)
    res = logits_pad[:, :cfg.class_num]                    # res = fc(y[1])

    # TODO(synk): hidn_converter / emb_converter are never applied here:
    # stu_hidden_size == tea_hidden_size -> flag=False, and
    # output_hidden_states=None so y carries no hidden-states entry.
    # TODO(synk): the original fc = nn.Linear(stu_hidden_layers, class_num)
    # cannot consume the (B, hidden) pooled output; a (hidden -> class_num)
    # classifier on y[1] is used instead (same as the previous version).
    y = (sequence_output, pooled)
    return res, y


# --------------------------------------------------------------------------
if __name__ == "__main__":
    B, S = 2, 8
    key = jax.random.PRNGKey(0)
    k_text, k_type = jax.random.split(key)

    text = jax.random.randint(k_text, (B, S), 0, CFG.stu_vocab_size,
                              dtype=jnp.int32)
    # `token` is (positionally) the attention mask in the PyTorch call:
    token = jnp.array([[1, 1, 1, 1, 1, 1, 1, 1],
                       [1, 1, 1, 1, 1, 1, 0, 0]], dtype=jnp.int32)
    # `mask` is (positionally) the token-type ids:
    mask = jax.random.randint(k_type, (B, S), 0, CFG.type_vocab_size,
                              dtype=jnp.int32)

    params = init_params(CFG, jax.random.PRNGKey(42))

    fwd = jax.jit(student_bert_classifier_forward)
    res, y = fwd(params, text, token, mask)
    jax.block_until_ready(res)
    jax.block_until_ready(y)

    assert res.shape == (B, CFG.class_num)
    assert y[0].shape == (B, S, CFG.stu_hidden_size)
    assert y[1].shape == (B, CFG.stu_hidden_size)
    assert bool(jnp.all(jnp.isfinite(res)))
    assert bool(jnp.all(jnp.isfinite(y[0])))
    assert bool(jnp.all(jnp.isfinite(y[1])))
    print("KERNEL_OK")
</pallas_src>

<mosaic_0001>
module attributes {stable_mosaic.version = 11 : i64} {
  func.func @_fused_kernel(%arg0: i32, %arg1: memref<16x32xf32, #tpu.memory_space<vmem>>, %arg2: memref<16x1xf32, #tpu.memory_space<vmem>>, %arg3: memref<1x16xf32, #tpu.memory_space<vmem>>, %arg4: memref<1x32xf32, #tpu.memory_space<vmem>>, %arg5: memref<1x32xf32, #tpu.memory_space<vmem>>, %arg6: memref<4x32xbf16, #tpu.memory_space<vmem>>, %arg7: memref<1x32x96xbf16, #tpu.memory_space<vmem>>, %arg8: memref<1x1x96xf32, #tpu.memory_space<vmem>>, %arg9: memref<1x32x32xbf16, #tpu.memory_space<vmem>>, %arg10: memref<1x1x32xf32, #tpu.memory_space<vmem>>, %arg11: memref<1x1x32xf32, #tpu.memory_space<vmem>>, %arg12: memref<1x1x32xf32, #tpu.memory_space<vmem>>, %arg13: memref<1x32x64xbf16, #tpu.memory_space<vmem>>, %arg14: memref<1x1x64xf32, #tpu.memory_space<vmem>>, %arg15: memref<1x64x32xbf16, #tpu.memory_space<vmem>>, %arg16: memref<1x1x32xf32, #tpu.memory_space<vmem>>, %arg17: memref<1x1x32xf32, #tpu.memory_space<vmem>>, %arg18: memref<1x1x32xf32, #tpu.memory_space<vmem>>, %arg19: memref<32x32xbf16, #tpu.memory_space<vmem>>, %arg20: memref<1x32xf32, #tpu.memory_space<vmem>>, %arg21: memref<32x128xbf16, #tpu.memory_space<vmem>>, %arg22: memref<1x128xf32, #tpu.memory_space<vmem>>, %arg23: memref<16x32xf32, #tpu.memory_space<vmem>>, %arg24: memref<2x32xf32, #tpu.memory_space<vmem>>, %arg25: memref<2x128xf32, #tpu.memory_space<vmem>>, %arg26: memref<16x16xf32, #tpu.memory_space<vmem>>) attributes {dimension_semantics = [#tpu.dimension_semantics<arbitrary>], iteration_bounds = array<i64: 2>, scalar_prefetch = 0 : i64, scratch_operands = 1 : i64, tpu.core_type = #tpu.core_type<tc>, window_params = [{pipeline_mode = #tpu.pipeline_mode<synchronous>, transform_indices = @transform_0, window_bounds = array<i64: 16, 32>}, {pipeline_mode = #tpu.pipeline_mode<synchronous>, transform_indices = @transform_1, window_bounds = array<i64: 16, 1>}, {pipeline_mode = #tpu.pipeline_mode<synchronous>, transform_indices = @transform_2, window_bounds = array<i64: 1, 16>}, {pipeline_mode = #tpu.pipeline_mode<synchronous>, transform_indices = @transform_3, window_bounds = array<i64: 1, 32>}, {pipeline_mode = #tpu.pipeline_mode<synchronous>, transform_indices = @transform_4, window_bounds = array<i64: 1, 32>}, {pipeline_mode = #tpu.pipeline_mode<synchronous>, transform_indices = @transform_5, window_bounds = array<i64: 4, 32>}, {transform_indices = @transform_6, window_bounds = array<i64: 1, 32, 96>}, {transform_indices = @transform_7, window_bounds = array<i64: 1, 1, 96>}, {transform_indices = @transform_8, window_bounds = array<i64: 1, 32, 32>}, {transform_indices = @transform_9, window_bounds = array<i64: 1, 1, 32>}, {transform_indices = @transform_10, window_bounds = array<i64: 1, 1, 32>}, {transform_indices = @transform_11, window_bounds = array<i64: 1, 1, 32>}, {transform_indices = @transform_12, window_bounds = array<i64: 1, 32, 64>}, {transform_indices = @transform_13, window_bounds = array<i64: 1, 1, 64>}, {transform_indices = @transform_14, window_bounds = array<i64: 1, 64, 32>}, {transform_indices = @transform_15, window_bounds = array<i64: 1, 1, 32>}, {transform_indices = @transform_16, window_bounds = array<i64: 1, 1, 32>}, {transform_indices = @transform_17, window_bounds = array<i64: 1, 1, 32>}, {pipeline_mode = #tpu.pipeline_mode<synchronous>, transform_indices = @transform_18, window_bounds = array<i64: 32, 32>}, {pipeline_mode = #tpu.pipeline_mode<synchronous>, transform_indices = @transform_19, window_bounds = array<i64: 1, 32>}, {pipeline_mode = #tpu.pipeline_mode<synchronous>, transform_indices = @transform_20, window_bounds = array<i64: 32, 128>}, {pipeline_mode = #tpu.pipeline_mode<synchronous>, transform_indices = @transform_21, window_bounds = array<i64: 1, 128>}, {pipeline_mode = #tpu.pipeline_mode<synchronous>, transform_indices = @transform_22, window_bounds = array<i64: 16, 32>}, {pipeline_mode = #tpu.pipeline_mode<synchronous>, transform_indices = @transform_23, window_bounds = array<i64: 2, 32>}, {pipeline_mode = #tpu.pipeline_mode<synchronous>, transform_indices = @transform_24, window_bounds = array<i64: 2, 128>}]} {
    %c0_i32 = arith.constant 0 : i32
    %0 = arith.cmpi eq, %arg0, %c0_i32 : i32
    %1 = arith.extui %0 : i1 to i32
    %c0_i32_0 = arith.constant 0 : i32
    %2 = arith.cmpi ne, %1, %c0_i32_0 : i32
    scf.if %2 {
      %c0_79 = arith.constant 0 : index
      %c0_80 = arith.constant 0 : index
      %200 = vector.load %arg1[%c0_79, %c0_80] : memref<16x32xf32, #tpu.memory_space<vmem>>, vector<16x32xf32>
      %c0_81 = arith.constant 0 : index
      %c0_82 = arith.constant 0 : index
      %201 = vector.load %arg4[%c0_81, %c0_82] : memref<1x32xf32, #tpu.memory_space<vmem>>, vector<1x32xf32>
      %c0_83 = arith.constant 0 : index
      %c0_84 = arith.constant 0 : index
      %202 = vector.load %arg5[%c0_83, %c0_84] : memref<1x32xf32, #tpu.memory_space<vmem>>, vector<1x32xf32>
      %cst_85 = arith.constant dense<0.000000e+00> : vector<16xf32>
      %203 = vector.multi_reduction <add>, %200, %cst_85 [1] : vector<16x32xf32> to vector<16xf32>
      %204 = vector.shape_cast %203 : vector<16xf32> to vector<16x1xf32>
      %cst_86 = arith.constant 3.200000e+01 : f32
      %205 = vector.broadcast %cst_86 : f32 to vector<16x1xf32>
      %206 = arith.divf %204, %205 : vector<16x1xf32>
      %207 = vector.broadcast %206 : vector<16x1xf32> to vector<16x32xf32>
      %208 = arith.subf %200, %207 : vector<16x32xf32>
      %209 = vector.broadcast %206 : vector<16x1xf32> to vector<16x32xf32>
      %210 = arith.subf %200, %209 : vector<16x32xf32>
      %211 = arith.mulf %208, %210 : vector<16x32xf32>
      %cst_87 = arith.constant dense<0.000000e+00> : vector<16xf32>
      %212 = vector.multi_reduction <add>, %211, %cst_87 [1] : vector<16x32xf32> to vector<16xf32>
      %213 = vector.shape_cast %212 : vector<16xf32> to vector<16x1xf32>
      %cst_88 = arith.constant 3.200000e+01 : f32
      %214 = vector.broadcast %cst_88 : f32 to vector<16x1xf32>
      %215 = arith.divf %213, %214 : vector<16x1xf32>
      %216 = vector.broadcast %206 : vector<16x1xf32> to vector<16x32xf32>
      %217 = arith.subf %200, %216 : vector<16x32xf32>
      %cst_89 = arith.constant 9.99999996E-13 : f32
      %218 = vector.broadcast %cst_89 : f32 to vector<16x1xf32>
      %219 = arith.addf %215, %218 : vector<16x1xf32>
      %220 = math.rsqrt %219 : vector<16x1xf32>
      %221 = vector.broadcast %220 : vector<16x1xf32> to vector<16x32xf32>
      %222 = arith.mulf %217, %221 : vector<16x32xf32>
      %223 = vector.broadcast %201 : vector<1x32xf32> to vector<16x32xf32>
      %224 = arith.mulf %222, %223 : vector<16x32xf32>
      %225 = vector.broadcast %202 : vector<1x32xf32> to vector<16x32xf32>
      %226 = arith.addf %224, %225 : vector<16x32xf32>
      %c0_90 = arith.constant 0 : index
      %c0_91 = arith.constant 0 : index
      %227 = vector.load %arg23[%c0_90, %c0_91] : memref<16x32xf32, #tpu.memory_space<vmem>>, vector<16x32xf32>
      tpu.vector_store %arg23[%c0_90, %c0_91], %226 {strides = array<i32>} : memref<16x32xf32, #tpu.memory_space<vmem>>, vector<16x32xf32>,
      %c0_92 = arith.constant 0 : index
      %c0_93 = arith.constant 0 : index
      %228 = vector.load %arg2[%c0_92, %c0_93] : memref<16x1xf32, #tpu.memory_space<vmem>>, vector<16x1xf32>
      %c0_94 = arith.constant 0 : index
      %c0_95 = arith.constant 0 : index
      %229 = vector.load %arg3[%c0_94, %c0_95] : memref<1x16xf32, #tpu.memory_space<vmem>>, vector<1x16xf32>
      %230 = vector.broadcast %228 : vector<16x1xf32> to vector<16x16xf32>
      %231 = vector.broadcast %229 : vector<1x16xf32> to vector<16x16xf32>
      %232 = arith.cmpf oeq, %230, %231 : vector<16x16xf32>
      %cst_96 = arith.constant 0.000000e+00 : f32
      %cst_97 = arith.constant -1.000000e+04 : f32
      %233 = vector.broadcast %cst_96 : f32 to vector<16x16xf32>
      %234 = vector.broadcast %cst_97 : f32 to vector<16x16xf32>
      %235 = arith.select %232, %233, %234 : vector<16x16xi1>, vector<16x16xf32>
      %c0_98 = arith.constant 0 : index
      %c0_99 = arith.constant 0 : index
      %236 = vector.load %arg26[%c0_98, %c0_99] : memref<16x16xf32, #tpu.memory_space<vmem>>, vector<16x16xf32>
      tpu.vector_store %arg26[%c0_98, %c0_99], %235 {strides = array<i32>} : memref<16x16xf32, #tpu.memory_space<vmem>>, vector<16x16xf32>,
      %cst_100 = arith.constant 0.000000e+00 : f32
      %237 = vector.broadcast %cst_100 : f32 to vector<2x32xf32>
      %c0_101 = arith.constant 0 : index
      %c0_102 = arith.constant 0 : index
      %238 = vector.load %arg24[%c0_101, %c0_102] : memref<2x32xf32, #tpu.memory_space<vmem>>, vector<2x32xf32>
      tpu.vector_store %arg24[%c0_101, %c0_102], %237 {strides = array<i32>} : memref<2x32xf32, #tpu.memory_space<vmem>>, vector<2x32xf32>,
      %cst_103 = arith.constant 0.000000e+00 : f32
      %239 = vector.broadcast %cst_103 : f32 to vector<2x128xf32>
      %c0_104 = arith.constant 0 : index
      %c0_105 = arith.constant 0 : index
      %240 = vector.load %arg25[%c0_104, %c0_105] : memref<2x128xf32, #tpu.memory_space<vmem>>, vector<2x128xf32>
      tpu.vector_store %arg25[%c0_104, %c0_105], %239 {strides = array<i32>} : memref<2x128xf32, #tpu.memory_space<vmem>>, vector<2x128xf32>,
    } else {
    }
    %c0 = arith.constant 0 : index
    %c0_1 = arith.constant 0 : index
    %3 = vector.load %arg23[%c0, %c0_1] : memref<16x32xf32, #tpu.memory_space<vmem>>, vector<16x32xf32>
    %4 = arith.truncf %3 : vector<16x32xf32> to vector<16x32xbf16>
    %c0_2 = arith.constant 0 : index
    %c0_3 = arith.constant 0 : index
    %c0_4 = arith.constant 0 : index
    %5 = vector.load %arg7[%c0_2, %c0_3, %c0_4] : memref<1x32x96xbf16, #tpu.memory_space<vmem>>, vector<1x32x96xbf16>
    %6 = vector.shape_cast %5 : vector<1x32x96xbf16> to vector<32x96xbf16>
    %cst = arith.constant dense<0.000000e+00> : vector<16x96xf32>
    %7 = tpu.matmul %4, %6, %cst {dimension_numbers = #tpu.dot_dimension_numbers<[1], [0], [0], [1], [0, 0, 1, 1], [], []>} : vector<16x32xbf16>, vector<32x96xbf16>, vector<16x96xf32> -> vector<16x96xf32>
    %c0_5 = arith.constant 0 : index
    %c0_6 = arith.constant 0 : index
    %c0_7 = arith.constant 0 : index
    %8 = vector.load %arg8[%c0_5, %c0_6, %c0_7] : memref<1x1x96xf32, #tpu.memory_space<vmem>>, vector<1x1x96xf32>
    %9 = vector.shape_cast %8 : vector<1x1x96xf32> to vector<1x96xf32>
    %10 = vector.broadcast %9 : vector<1x96xf32> to vector<16x96xf32>
    %11 = arith.addf %7, %10 : vector<16x96xf32>
    %12 = vector.extract_strided_slice %11 {offsets = [0, 0], sizes = [16, 32], strides = [1, 1]} : vector<16x96xf32> to vector<16x32xf32>
    %13 = arith.truncf %12 : vector<16x32xf32> to vector<16x32xbf16>
    %14 = vector.extract_strided_slice %11 {offsets = [0, 32], sizes = [16, 32], strides = [1, 1]} : vector<16x96xf32> to vector<16x32xf32>
    %15 = arith.truncf %14 : vector<16x32xf32> to vector<16x32xbf16>
    %16 = vector.extract_strided_slice %11 {offsets = [0, 64], sizes = [16, 32], strides = [1, 1]} : vector<16x96xf32> to vector<16x32xf32>
    %17 = arith.truncf %16 : vector<16x32xf32> to vector<16x32xbf16>
    %c0_8 = arith.constant 0 : index
    %c0_9 = arith.constant 0 : index
    %18 = vector.load %arg26[%c0_8, %c0_9] : memref<16x16xf32, #tpu.memory_space<vmem>>, vector<16x16xf32>
    %c0_10 = arith.constant 0 : index
    %c0_11 = arith.constant 0 : index
    %19 = vector.load %arg6[%c0_10, %c0_11] : memref<4x32xbf16, #tpu.memory_space<vmem>>, vector<4x32xbf16>
    %cst_12 = arith.constant 0.000000e+00 : f32
    %20 = vector.broadcast %cst_12 : f32 to vector<16x32xf32>
    %21 = vector.extract_strided_slice %19 {offsets = [0, 0], sizes = [1, 32], strides = [1, 1]} : vector<4x32xbf16> to vector<1x32xbf16>
    %22 = vector.broadcast %21 : vector<1x32xbf16> to vector<16x32xbf16>
    %23 = arith.mulf %13, %22 : vector<16x32xbf16>
    %cst_13 = arith.constant dense<0.000000e+00> : vector<16x16xf32>
    %24 = tpu.matmul %23, %15, %cst_13 {dimension_numbers = #tpu.dot_dimension_numbers<[1], [1], [0], [0], [0, 0, 1, 0], [], []>} : vector<16x32xbf16>, vector<16x32xbf16>, vector<16x16xf32> -> vector<16x16xf32>
    %25 = arith.addf %24, %18 : vector<16x16xf32>
    %cst_14 = arith.constant dense<0xFF800000> : vector<16xf32>
    %26 = vector.multi_reduction <maximumf>, %25, %cst_14 [1] : vector<16x16xf32> to vector<16xf32>
    %27 = vector.shape_cast %26 : vector<16xf32> to vector<16x1xf32>
    %28 = vector.broadcast %27 : vector<16x1xf32> to vector<16x16xf32>
    %29 = arith.subf %25, %28 : vector<16x16xf32>
    %30 = math.exp %29 : vector<16x16xf32>
    %cst_15 = arith.constant dense<0.000000e+00> : vector<16xf32>
    %31 = vector.multi_reduction <add>, %30, %cst_15 [1] : vector<16x16xf32> to vector<16xf32>
    %32 = vector.shape_cast %31 : vector<16xf32> to vector<16x1xf32>
    %33 = tpu.reciprocal %32 {approx = true} : vector<16x1xf32> -> vector<16x1xf32>
    %34 = vector.broadcast %33 : vector<16x1xf32> to vector<16x16xf32>
    %35 = arith.mulf %30, %34 : vector<16x16xf32>
    %36 = arith.truncf %35 : vector<16x16xf32> to vector<16x16xbf16>
    %37 = vector.broadcast %21 : vector<1x32xbf16> to vector<16x32xbf16>
    %38 = arith.mulf %17, %37 : vector<16x32xbf16>
    %cst_16 = arith.constant dense<0.000000e+00> : vector<16x32xf32>
    %39 = tpu.matmul %36, %38, %cst_16 {dimension_numbers = #tpu.dot_dimension_numbers<[1], [0], [0], [1], [0, 0, 1, 1], [], []>} : vector<16x16xbf16>, vector<16x32xbf16>, vector<16x32xf32> -> vector<16x32xf32>
    %40 = arith.addf %20, %39 : vector<16x32xf32>
    %41 = vector.extract_strided_slice %19 {offsets = [1, 0], sizes = [1, 32], strides = [1, 1]} : vector<4x32xbf16> to vector<1x32xbf16>
    %42 = vector.broadcast %41 : vector<1x32xbf16> to vector<16x32xbf16>
    %43 = arith.mulf %13, %42 : vector<16x32xbf16>
    %cst_17 = arith.constant dense<0.000000e+00> : vector<16x16xf32>
    %44 = tpu.matmul %43, %15, %cst_17 {dimension_numbers = #tpu.dot_dimension_numbers<[1], [1], [0], [0], [0, 0, 1, 0], [], []>} : vector<16x32xbf16>, vector<16x32xbf16>, vector<16x16xf32> -> vector<16x16xf32>
    %45 = arith.addf %44, %18 : vector<16x16xf32>
    %cst_18 = arith.constant dense<0xFF800000> : vector<16xf32>
    %46 = vector.multi_reduction <maximumf>, %45, %cst_18 [1] : vector<16x16xf32> to vector<16xf32>
    %47 = vector.shape_cast %46 : vector<16xf32> to vector<16x1xf32>
    %48 = vector.broadcast %47 : vector<16x1xf32> to vector<16x16xf32>
    %49 = arith.subf %45, %48 : vector<16x16xf32>
    %50 = math.exp %49 : vector<16x16xf32>
    %cst_19 = arith.constant dense<0.000000e+00> : vector<16xf32>
    %51 = vector.multi_reduction <add>, %50, %cst_19 [1] : vector<16x16xf32> to vector<16xf32>
    %52 = vector.shape_cast %51 : vector<16xf32> to vector<16x1xf32>
    %53 = tpu.reciprocal %52 {approx = true} : vector<16x1xf32> -> vector<16x1xf32>
    %54 = vector.broadcast %53 : vector<16x1xf32> to vector<16x16xf32>
    %55 = arith.mulf %50, %54 : vector<16x16xf32>
    %56 = arith.truncf %55 : vector<16x16xf32> to vector<16x16xbf16>
    %57 = vector.broadcast %41 : vector<1x32xbf16> to vector<16x32xbf16>
    %58 = arith.mulf %17, %57 : vector<16x32xbf16>
    %cst_20 = arith.constant dense<0.000000e+00> : vector<16x32xf32>
    %59 = tpu.matmul %56, %58, %cst_20 {dimension_numbers = #tpu.dot_dimension_numbers<[1], [0], [0], [1], [0, 0, 1, 1], [], []>} : vector<16x16xbf16>, vector<16x32xbf16>, vector<16x32xf32> -> vector<16x32xf32>
    %60 = arith.addf %40, %59 : vector<16x32xf32>
    %61 = vector.extract_strided_slice %19 {offsets = [2, 0], sizes = [1, 32], strides = [1, 1]} : vector<4x32xbf16> to vector<1x32xbf16>
    %62 = vector.broadcast %61 : vector<1x32xbf16> to vector<16x32xbf16>
    %63 = arith.mulf %13, %62 : vector<16x32xbf16>
    %cst_21 = arith.constant dense<0.000000e+00> : vector<16x16xf32>
    %64 = tpu.matmul %63, %15, %cst_21 {dimension_numbers = #tpu.dot_dimension_numbers<[1], [1], [0], [0], [0, 0, 1, 0], [], []>} : vector<16x32xbf16>, vector<16x32xbf16>, vector<16x16xf32> -> vector<16x16xf32>
    %65 = arith.addf %64, %18 : vector<16x16xf32>
    %cst_22 = arith.constant dense<0xFF800000> : vector<16xf32>
    %66 = vector.multi_reduction <maximumf>, %65, %cst_22 [1] : vector<16x16xf32> to vector<16xf32>
    %67 = vector.shape_cast %66 : vector<16xf32> to vector<16x1xf32>
    %68 = vector.broadcast %67 : vector<16x1xf32> to vector<16x16xf32>
    %69 = arith.subf %65, %68 : vector<16x16xf32>
    %70 = math.exp %69 : vector<16x16xf32>
    %cst_23 = arith.constant dense<0.000000e+00> : vector<16xf32>
    %71 = vector.multi_reduction <add>, %70, %cst_23 [1] : vector<16x16xf32> to vector<16xf32>
    %72 = vector.shape_cast %71 : vector<16xf32> to vector<16x1xf32>
    %73 = tpu.reciprocal %72 {approx = true} : vector<16x1xf32> -> vector<16x1xf32>
    %74 = vector.broadcast %73 : vector<16x1xf32> to vector<16x16xf32>
    %75 = arith.mulf %70, %74 : vector<16x16xf32>
    %76 = arith.truncf %75 : vector<16x16xf32> to vector<16x16xbf16>
    %77 = vector.broadcast %61 : vector<1x32xbf16> to vector<16x32xbf16>
    %78 = arith.mulf %17, %77 : vector<16x32xbf16>
    %cst_24 = arith.constant dense<0.000000e+00> : vector<16x32xf32>
    %79 = tpu.matmul %76, %78, %cst_24 {dimension_numbers = #tpu.dot_dimension_numbers<[1], [0], [0], [1], [0, 0, 1, 1], [], []>} : vector<16x16xbf16>, vector<16x32xbf16>, vector<16x32xf32> -> vector<16x32xf32>
    %80 = arith.addf %60, %79 : vector<16x32xf32>
    %81 = vector.extract_strided_slice %19 {offsets = [3, 0], sizes = [1, 32], strides = [1, 1]} : vector<4x32xbf16> to vector<1x32xbf16>
    %82 = vector.broadcast %81 : vector<1x32xbf16> to vector<16x32xbf16>
    %83 = arith.mulf %13, %82 : vector<16x32xbf16>
    %cst_25 = arith.constant dense<0.000000e+00> : vector<16x16xf32>
    %84 = tpu.matmul %83, %15, %cst_25 {dimension_numbers = #tpu.dot_dimension_numbers<[1], [1], [0], [0], [0, 0, 1, 0], [], []>} : vector<16x32xbf16>, vector<16x32xbf16>, vector<16x16xf32> -> vector<16x16xf32>
    %85 = arith.addf %84, %18 : vector<16x16xf32>
    %cst_26 = arith.constant dense<0xFF800000> : vector<16xf32>
    %86 = vector.multi_reduction <maximumf>, %85, %cst_26 [1] : vector<16x16xf32> to vector<16xf32>
    %87 = vector.shape_cast %86 : vector<16xf32> to vector<16x1xf32>
    %88 = vector.broadcast %87 : vector<16x1xf32> to vector<16x16xf32>
    %89 = arith.subf %85, %88 : vector<16x16xf32>
    %90 = math.exp %89 : vector<16x16xf32>
    %cst_27 = arith.constant dense<0.000000e+00> : vector<16xf32>
    %91 = vector.multi_reduction <add>, %90, %cst_27 [1] : vector<16x16xf32> to vector<16xf32>
    %92 = vector.shape_cast %91 : vector<16xf32> to vector<16x1xf32>
    %93 = tpu.reciprocal %92 {approx = true} : vector<16x1xf32> -> vector<16x1xf32>
    %94 = vector.broadcast %93 : vector<16x1xf32> to vector<16x16xf32>
    %95 = arith.mulf %90, %94 : vector<16x16xf32>
    %96 = arith.truncf %95 : vector<16x16xf32> to vector<16x16xbf16>
    %97 = vector.broadcast %81 : vector<1x32xbf16> to vector<16x32xbf16>
    %98 = arith.mulf %17, %97 : vector<16x32xbf16>
    %cst_28 = arith.constant dense<0.000000e+00> : vector<16x32xf32>
    %99 = tpu.matmul %96, %98, %cst_28 {dimension_numbers = #tpu.dot_dimension_numbers<[1], [0], [0], [1], [0, 0, 1, 1], [], []>} : vector<16x16xbf16>, vector<16x32xbf16>, vector<16x32xf32> -> vector<16x32xf32>
    %100 = arith.addf %80, %99 : vector<16x32xf32>
    %101 = arith.truncf %100 : vector<16x32xf32> to vector<16x32xbf16>
    %c0_29 = arith.constant 0 : index
    %c0_30 = arith.constant 0 : index
    %c0_31 = arith.constant 0 : index
    %102 = vector.load %arg9[%c0_29, %c0_30, %c0_31] : memref<1x32x32xbf16, #tpu.memory_space<vmem>>, vector<1x32x32xbf16>
    %103 = vector.shape_cast %102 : vector<1x32x32xbf16> to vector<32x32xbf16>
    %cst_32 = arith.constant dense<0.000000e+00> : vector<16x32xf32>
    %104 = tpu.matmul %101, %103, %cst_32 {dimension_numbers = #tpu.dot_dimension_numbers<[1], [0], [0], [1], [0, 0, 1, 1], [], []>} : vector<16x32xbf16>, vector<32x32xbf16>, vector<16x32xf32> -> vector<16x32xf32>
    %c0_33 = arith.constant 0 : index
    %c0_34 = arith.constant 0 : index
    %c0_35 = arith.constant 0 : index
    %105 = vector.load %arg10[%c0_33, %c0_34, %c0_35] : memref<1x1x32xf32, #tpu.memory_space<vmem>>, vector<1x1x32xf32>
    %106 = vector.shape_cast %105 : vector<1x1x32xf32> to vector<1x32xf32>
    %107 = vector.broadcast %106 : vector<1x32xf32> to vector<16x32xf32>
    %108 = arith.addf %104, %107 : vector<16x32xf32>
    %109 = arith.addf %108, %3 : vector<16x32xf32>
    %c0_36 = arith.constant 0 : index
    %c0_37 = arith.constant 0 : index
    %c0_38 = arith.constant 0 : index
    %110 = vector.load %arg11[%c0_36, %c0_37, %c0_38] : memref<1x1x32xf32, #tpu.memory_space<vmem>>, vector<1x1x32xf32>
    %111 = vector.shape_cast %110 : vector<1x1x32xf32> to vector<1x32xf32>
    %c0_39 = arith.constant 0 : index
    %c0_40 = arith.constant 0 : index
    %c0_41 = arith.constant 0 : index
    %112 = vector.load %arg12[%c0_39, %c0_40, %c0_41] : memref<1x1x32xf32, #tpu.memory_space<vmem>>, vector<1x1x32xf32>
    %113 = vector.shape_cast %112 : vector<1x1x32xf32> to vector<1x32xf32>
    %cst_42 = arith.constant dense<0.000000e+00> : vector<16xf32>
    %114 = vector.multi_reduction <add>, %109, %cst_42 [1] : vector<16x32xf32> to vector<16xf32>
    %115 = vector.shape_cast %114 : vector<16xf32> to vector<16x1xf32>
    %cst_43 = arith.constant 3.200000e+01 : f32
    %116 = vector.broadcast %cst_43 : f32 to vector<16x1xf32>
    %117 = arith.divf %115, %116 : vector<16x1xf32>
    %118 = vector.broadcast %117 : vector<16x1xf32> to vector<16x32xf32>
    %119 = arith.subf %109, %118 : vector<16x32xf32>
    %120 = vector.broadcast %117 : vector<16x1xf32> to vector<16x32xf32>
    %121 = arith.subf %109, %120 : vector<16x32xf32>
    %122 = arith.mulf %119, %121 : vector<16x32xf32>
    %cst_44 = arith.constant dense<0.000000e+00> : vector<16xf32>
    %123 = vector.multi_reduction <add>, %122, %cst_44 [1] : vector<16x32xf32> to vector<16xf32>
    %124 = vector.shape_cast %123 : vector<16xf32> to vector<16x1xf32>
    %cst_45 = arith.constant 3.200000e+01 : f32
    %125 = vector.broadcast %cst_45 : f32 to vector<16x1xf32>
    %126 = arith.divf %124, %125 : vector<16x1xf32>
    %127 = vector.broadcast %117 : vector<16x1xf32> to vector<16x32xf32>
    %128 = arith.subf %109, %127 : vector<16x32xf32>
    %cst_46 = arith.constant 9.99999996E-13 : f32
    %129 = vector.broadcast %cst_46 : f32 to vector<16x1xf32>
    %130 = arith.addf %126, %129 : vector<16x1xf32>
    %131 = math.rsqrt %130 : vector<16x1xf32>
    %132 = vector.broadcast %131 : vector<16x1xf32> to vector<16x32xf32>
    %133 = arith.mulf %128, %132 : vector<16x32xf32>
    %134 = vector.broadcast %111 : vector<1x32xf32> to vector<16x32xf32>
    %135 = arith.mulf %133, %134 : vector<16x32xf32>
    %136 = vector.broadcast %113 : vector<1x32xf32> to vector<16x32xf32>
    %137 = arith.addf %135, %136 : vector<16x32xf32>
    %138 = arith.truncf %137 : vector<16x32xf32> to vector<16x32xbf16>
    %c0_47 = arith.constant 0 : index
    %c0_48 = arith.constant 0 : index
    %c0_49 = arith.constant 0 : index
    %139 = vector.load %arg13[%c0_47, %c0_48, %c0_49] : memref<1x32x64xbf16, #tpu.memory_space<vmem>>, vector<1x32x64xbf16>
    %140 = vector.shape_cast %139 : vector<1x32x64xbf16> to vector<32x64xbf16>
    %cst_50 = arith.constant dense<0.000000e+00> : vector<16x64xf32>
    %141 = tpu.matmul %138, %140, %cst_50 {dimension_numbers = #tpu.dot_dimension_numbers<[1], [0], [0], [1], [0, 0, 1, 1], [], []>} : vector<16x32xbf16>, vector<32x64xbf16>, vector<16x64xf32> -> vector<16x64xf32>
    %c0_51 = arith.constant 0 : index
    %c0_52 = arith.constant 0 : index
    %c0_53 = arith.constant 0 : index
    %142 = vector.load %arg14[%c0_51, %c0_52, %c0_53] : memref<1x1x64xf32, #tpu.memory_space<vmem>>, vector<1x1x64xf32>
    %143 = vector.shape_cast %142 : vector<1x1x64xf32> to vector<1x64xf32>
    %144 = vector.broadcast %143 : vector<1x64xf32> to vector<16x64xf32>
    %145 = arith.addf %141, %144 : vector<16x64xf32>
    %cst_54 = arith.constant 5.000000e-01 : f32
    %146 = vector.broadcast %cst_54 : f32 to vector<16x64xf32>
    %147 = arith.mulf %146, %145 : vector<16x64xf32>
    %cst_55 = arith.constant 4.471500e-02 : f32
    %148 = vector.broadcast %cst_55 : f32 to vector<16x64xf32>
    %149 = arith.mulf %148, %145 : vector<16x64xf32>
    %150 = arith.mulf %149, %145 : vector<16x64xf32>
    %151 = arith.mulf %150, %145 : vector<16x64xf32>
    %152 = arith.addf %145, %151 : vector<16x64xf32>
    %cst_56 = arith.constant 0.797884583 : f32
    %153 = vector.broadcast %cst_56 : f32 to vector<16x64xf32>
    %154 = arith.mulf %153, %152 : vector<16x64xf32>
    %155 = math.tanh %154 : vector<16x64xf32>
    %cst_57 = arith.constant 1.000000e+00 : f32
    %156 = vector.broadcast %cst_57 : f32 to vector<16x64xf32>
    %157 = arith.addf %156, %155 : vector<16x64xf32>
    %158 = arith.mulf %147, %157 : vector<16x64xf32>
    %159 = arith.truncf %158 : vector<16x64xf32> to vector<16x64xbf16>
    %c0_58 = arith.constant 0 : index
    %c0_59 = arith.constant 0 : index
    %c0_60 = arith.constant 0 : index
    %160 = vector.load %arg15[%c0_58, %c0_59, %c0_60] : memref<1x64x32xbf16, #tpu.memory_space<vmem>>, vector<1x64x32xbf16>
    %161 = vector.shape_cast %160 : vector<1x64x32xbf16> to vector<64x32xbf16>
    %cst_61 = arith.constant dense<0.000000e+00> : vector<16x32xf32>
    %162 = tpu.matmul %159, %161, %cst_61 {dimension_numbers = #tpu.dot_dimension_numbers<[1], [0], [0], [1], [0, 0, 1, 1], [], []>} : vector<16x64xbf16>, vector<64x32xbf16>, vector<16x32xf32> -> vector<16x32xf32>
    %c0_62 = arith.constant 0 : index
    %c0_63 = arith.constant 0 : index
    %c0_64 = arith.constant 0 : index
    %163 = vector.load %arg16[%c0_62, %c0_63, %c0_64] : memref<1x1x32xf32, #tpu.memory_space<vmem>>, vector<1x1x32xf32>
    %164 = vector.shape_cast %163 : vector<1x1x32xf32> to vector<1x32xf32>
    %165 = vector.broadcast %164 : vector<1x32xf32> to vector<16x32xf32>
    %166 = arith.addf %162, %165 : vector<16x32xf32>
    %167 = arith.addf %166, %137 : vector<16x32xf32>
    %c0_65 = arith.constant 0 : index
    %c0_66 = arith.constant 0 : index
    %c0_67 = arith.constant 0 : index
    %168 = vector.load %arg17[%c0_65, %c0_66, %c0_67] : memref<1x1x32xf32, #tpu.memory_space<vmem>>, vector<1x1x32xf32>
    %169 = vector.shape_cast %168 : vector<1x1x32xf32> to vector<1x32xf32>
    %c0_68 = arith.constant 0 : index
    %c0_69 = arith.constant 0 : index
    %c0_70 = arith.constant 0 : index
    %170 = vector.load %arg18[%c0_68, %c0_69, %c0_70] : memref<1x1x32xf32, #tpu.memory_space<vmem>>, vector<1x1x32xf32>
    %171 = vector.shape_cast %170 : vector<1x1x32xf32> to vector<1x32xf32>
    %cst_71 = arith.constant dense<0.000000e+00> : vector<16xf32>
    %172 = vector.multi_reduction <add>, %167, %cst_71 [1] : vector<16x32xf32> to vector<16xf32>
    %173 = vector.shape_cast %172 : vector<16xf32> to vector<16x1xf32>
    %cst_72 = arith.constant 3.200000e+01 : f32
    %174 = vector.broadcast %cst_72 : f32 to vector<16x1xf32>
    %175 = arith.divf %173, %174 : vector<16x1xf32>
    %176 = vector.broadcast %175 : vector<16x1xf32> to vector<16x32xf32>
    %177 = arith.subf %167, %176 : vector<16x32xf32>
    %178 = vector.broadcast %175 : vector<16x1xf32> to vector<16x32xf32>
    %179 = arith.subf %167, %178 : vector<16x32xf32>
    %180 = arith.mulf %177, %179 : vector<16x32xf32>
    %cst_73 = arith.constant dense<0.000000e+00> : vector<16xf32>
    %181 = vector.multi_reduction <add>, %180, %cst_73 [1] : vector<16x32xf32> to vector<16xf32>
    %182 = vector.shape_cast %181 : vector<16xf32> to vector<16x1xf32>
    %cst_74 = arith.constant 3.200000e+01 : f32
    %183 = vector.broadcast %cst_74 : f32 to vector<16x1xf32>
    %184 = arith.divf %182, %183 : vector<16x1xf32>
    %185 = vector.broadcast %175 : vector<16x1xf32> to vector<16x32xf32>
    %186 = arith.subf %167, %185 : vector<16x32xf32>
    %cst_75 = arith.constant 9.99999996E-13 : f32
    %187 = vector.broadcast %cst_75 : f32 to vector<16x1xf32>
    %188 = arith.addf %184, %187 : vector<16x1xf32>
    %189 = math.rsqrt %188 : vector<16x1xf32>
    %190 = vector.broadcast %189 : vector<16x1xf32> to vector<16x32xf32>
    %191 = arith.mulf %186, %190 : vector<16x32xf32>
    %192 = vector.broadcast %169 : vector<1x32xf32> to vector<16x32xf32>
    %193 = arith.mulf %191, %192 : vector<16x32xf32>
    %194 = vector.broadcast %171 : vector<1x32xf32> to vector<16x32xf32>
    %195 = arith.addf %193, %194 : vector<16x32xf32>
    %c0_76 = arith.constant 0 : index
    %c0_77 = arith.constant 0 : index
    %196 = vector.load %arg23[%c0_76, %c0_77] : memref<16x32xf32, #tpu.memory_space<vmem>>, vector<16x32xf32>
    tpu.vector_store %arg23[%c0_76, %c0_77], %195 {strides = array<i32>} : memref<16x32xf32, #tpu.memory_space<vmem>>, vector<16x32xf32>,
    %c1_i32 = arith.constant 1 : i32
    %197 = arith.cmpi eq, %arg0, %c1_i32 : i32
    %198 = arith.extui %197 : i1 to i32
    %c0_i32_78 = arith.constant 0 : i32
    %199 = arith.cmpi ne, %198, %c0_i32_78 : i32
    scf.if %199 {
      %200 = vector.extract_strided_slice %195 {offsets = [0, 0], sizes = [1, 32], strides = [1, 1]} : vector<16x32xf32> to vector<1x32xf32>
      %201 = vector.extract_strided_slice %195 {offsets = [8, 0], sizes = [1, 32], strides = [1, 1]} : vector<16x32xf32> to vector<1x32xf32>
      %202 = tpu.concatenate %200, %201 in 0 : vector<1x32xf32>, vector<1x32xf32> -> vector<2x32xf32>
      %203 = arith.truncf %202 : vector<2x32xf32> to vector<2x32xbf16>
      %c0_79 = arith.constant 0 : index
      %c0_80 = arith.constant 0 : index
      %204 = vector.load %arg19[%c0_79, %c0_80] : memref<32x32xbf16, #tpu.memory_space<vmem>>, vector<32x32xbf16>
      %cst_81 = arith.constant dense<0.000000e+00> : vector<2x32xf32>
      %205 = tpu.matmul %203, %204, %cst_81 {dimension_numbers = #tpu.dot_dimension_numbers<[1], [0], [0], [1], [0, 0, 1, 1], [], []>} : vector<2x32xbf16>, vector<32x32xbf16>, vector<2x32xf32> -> vector<2x32xf32>
      %c0_82 = arith.constant 0 : index
      %c0_83 = arith.constant 0 : index
      %206 = vector.load %arg20[%c0_82, %c0_83] : memref<1x32xf32, #tpu.memory_space<vmem>>, vector<1x32xf32>
      %207 = vector.broadcast %206 : vector<1x32xf32> to vector<2x32xf32>
      %208 = arith.addf %205, %207 : vector<2x32xf32>
      %209 = math.tanh %208 : vector<2x32xf32>
      %c0_84 = arith.constant 0 : index
      %c0_85 = arith.constant 0 : index
      %210 = vector.load %arg24[%c0_84, %c0_85] : memref<2x32xf32, #tpu.memory_space<vmem>>, vector<2x32xf32>
      tpu.vector_store %arg24[%c0_84, %c0_85], %209 {strides = array<i32>} : memref<2x32xf32, #tpu.memory_space<vmem>>, vector<2x32xf32>,
      %211 = arith.truncf %209 : vector<2x32xf32> to vector<2x32xbf16>
      %c0_86 = arith.constant 0 : index
      %c0_87 = arith.constant 0 : index
      %212 = vector.load %arg21[%c0_86, %c0_87] : memref<32x128xbf16, #tpu.memory_space<vmem>>, vector<32x128xbf16>
      %cst_88 = arith.constant dense<0.000000e+00> : vector<2x128xf32>
      %213 = tpu.matmul %211, %212, %cst_88 {dimension_numbers = #tpu.dot_dimension_numbers<[1], [0], [0], [1], [0, 0, 1, 1], [], []>} : vector<2x32xbf16>, vector<32x128xbf16>, vector<2x128xf32> -> vector<2x128xf32>
      %c0_89 = arith.constant 0 : index
      %c0_90 = arith.constant 0 : index
      %214 = vector.load %arg22[%c0_89, %c0_90] : memref<1x128xf32, #tpu.memory_space<vmem>>, vector<1x128xf32>
      %215 = vector.broadcast %214 : vector<1x128xf32> to vector<2x128xf32>
      %216 = arith.addf %213, %215 : vector<2x128xf32>
      %c0_91 = arith.constant 0 : index
      %c0_92 = arith.constant 0 : index
      %217 = vector.load %arg25[%c0_91, %c0_92] : memref<2x128xf32, #tpu.memory_space<vmem>>, vector<2x128xf32>
      tpu.vector_store %arg25[%c0_91, %c0_92], %216 {strides = array<i32>} : memref<2x128xf32, #tpu.memory_space<vmem>>, vector<2x128xf32>,
    } else {
    }
    return
  }
  func.func @transform_0(%arg0: i32) -> (i32, i32) {
    %c0_i32 = arith.constant 0 : i32
    %c0_i32_0 = arith.constant 0 : i32
    %c0_i32_1 = arith.constant 0 : i32
    return %c0_i32, %c0_i32_0 : i32, i32
  }
  func.func @transform_1(%arg0: i32) -> (i32, i32) {
    %c0_i32 = arith.constant 0 : i32
    %c0_i32_0 = arith.constant 0 : i32
    %c0_i32_1 = arith.constant 0 : i32
    return %c0_i32, %c0_i32_0 : i32, i32
  }
  func.func @transform_2(%arg0: i32) -> (i32, i32) {
    %c0_i32 = arith.constant 0 : i32
    %c0_i32_0 = arith.constant 0 : i32
    %c0_i32_1 = arith.constant 0 : i32
    return %c0_i32, %c0_i32_0 : i32, i32
  }
  func.func @transform_3(%arg0: i32) -> (i32, i32) {
    %c0_i32 = arith.constant 0 : i32
    %c0_i32_0 = arith.constant 0 : i32
    %c0_i32_1 = arith.constant 0 : i32
    return %c0_i32, %c0_i32_0 : i32, i32
  }
  func.func @transform_4(%arg0: i32) -> (i32, i32) {
    %c0_i32 = arith.constant 0 : i32
    %c0_i32_0 = arith.constant 0 : i32
    %c0_i32_1 = arith.constant 0 : i32
    return %c0_i32, %c0_i32_0 : i32, i32
  }
  func.func @transform_5(%arg0: i32) -> (i32, i32) {
    %c0_i32 = arith.constant 0 : i32
    %c0_i32_0 = arith.constant 0 : i32
    %c0_i32_1 = arith.constant 0 : i32
    return %c0_i32, %c0_i32_0 : i32, i32
  }
  func.func @transform_6(%arg0: i32) -> (i32, i32, i32) {
    %c0_i32 = arith.constant 0 : i32
    %c0_i32_0 = arith.constant 0 : i32
    %c0_i32_1 = arith.constant 0 : i32
    return %arg0, %c0_i32, %c0_i32_0 : i32, i32, i32
  }
  func.func @transform_7(%arg0: i32) -> (i32, i32, i32) {
    %c0_i32 = arith.constant 0 : i32
    %c0_i32_0 = arith.constant 0 : i32
    %c0_i32_1 = arith.constant 0 : i32
    return %arg0, %c0_i32, %c0_i32_0 : i32, i32, i32
  }
  func.func @transform_8(%arg0: i32) -> (i32, i32, i32) {
    %c0_i32 = arith.constant 0 : i32
    %c0_i32_0 = arith.constant 0 : i32
    %c0_i32_1 = arith.constant 0 : i32
    return %arg0, %c0_i32, %c0_i32_0 : i32, i32, i32
  }
  func.func @transform_9(%arg0: i32) -> (i32, i32, i32) {
    %c0_i32 = arith.constant 0 : i32
    %c0_i32_0 = arith.constant 0 : i32
    %c0_i32_1 = arith.constant 0 : i32
    return %arg0, %c0_i32, %c0_i32_0 : i32, i32, i32
  }
  func.func @transform_10(%arg0: i32) -> (i32, i32, i32) {
    %c0_i32 = arith.constant 0 : i32
    %c0_i32_0 = arith.constant 0 : i32
    %c0_i32_1 = arith.constant 0 : i32
    return %arg0, %c0_i32, %c0_i32_0 : i32, i32, i32
  }
  func.func @transform_11(%arg0: i32) -> (i32, i32, i32) {
    %c0_i32 = arith.constant 0 : i32
    %c0_i32_0 = arith.constant 0 : i32
    %c0_i32_1 = arith.constant 0 : i32
    return %arg0, %c0_i32, %c0_i32_0 : i32, i32, i32
  }
  func.func @transform_12(%arg0: i32) -> (i32, i32, i32) {
    %c0_i32 = arith.constant 0 : i32
    %c0_i32_0 = arith.constant 0 : i32
    %c0_i32_1 = arith.constant 0 : i32
    return %arg0, %c0_i32, %c0_i32_0 : i32, i32, i32
  }
  func.func @transform_13(%arg0: i32) -> (i32, i32, i32) {
    %c0_i32 = arith.constant 0 : i32
    %c0_i32_0 = arith.constant 0 : i32
    %c0_i32_1 = arith.constant 0 : i32
    return %arg0, %c0_i32, %c0_i32_0 : i32, i32, i32
  }
  func.func @transform_14(%arg0: i32) -> (i32, i32, i32) {
    %c0_i32 = arith.constant 0 : i32
    %c0_i32_0 = arith.constant 0 : i32
    %c0_i32_1 = arith.constant 0 : i32
    return %arg0, %c0_i32, %c0_i32_0 : i32, i32, i32
  }
  func.func @transform_15(%arg0: i32) -> (i32, i32, i32) {
    %c0_i32 = arith.constant 0 : i32
    %c0_i32_0 = arith.constant 0 : i32
    %c0_i32_1 = arith.constant 0 : i32
    return %arg0, %c0_i32, %c0_i32_0 : i32, i32, i32
  }
  func.func @transform_16(%arg0: i32) -> (i32, i32, i32) {
    %c0_i32 = arith.constant 0 : i32
    %c0_i32_0 = arith.constant 0 : i32
    %c0_i32_1 = arith.constant 0 : i32
    return %arg0, %c0_i32, %c0_i32_0 : i32, i32, i32
  }
  func.func @transform_17(%arg0: i32) -> (i32, i32, i32) {
    %c0_i32 = arith.constant 0 : i32
    %c0_i32_0 = arith.constant 0 : i32
    %c0_i32_1 = arith.constant 0 : i32
    return %arg0, %c0_i32, %c0_i32_0 : i32, i32, i32
  }
  func.func @transform_18(%arg0: i32) -> (i32, i32) {
    %c0_i32 = arith.constant 0 : i32
    %c0_i32_0 = arith.constant 0 : i32
    %c0_i32_1 = arith.constant 0 : i32
    return %c0_i32, %c0_i32_0 : i32, i32
  }
  func.func @transform_19(%arg0: i32) -> (i32, i32) {
    %c0_i32 = arith.constant 0 : i32
    %c0_i32_0 = arith.constant 0 : i32
    %c0_i32_1 = arith.constant 0 : i32
    return %c0_i32, %c0_i32_0 : i32, i32
  }
  func.func @transform_20(%arg0: i32) -> (i32, i32) {
    %c0_i32 = arith.constant 0 : i32
    %c0_i32_0 = arith.constant 0 : i32
    %c0_i32_1 = arith.constant 0 : i32
    return %c0_i32, %c0_i32_0 : i32, i32
  }
  func.func @transform_21(%arg0: i32) -> (i32, i32) {
    %c0_i32 = arith.constant 0 : i32
    %c0_i32_0 = arith.constant 0 : i32
    %c0_i32_1 = arith.constant 0 : i32
    return %c0_i32, %c0_i32_0 : i32, i32
  }
  func.func @transform_22(%arg0: i32) -> (i32, i32) {
    %c0_i32 = arith.constant 0 : i32
    %c0_i32_0 = arith.constant 0 : i32
    %c0_i32_1 = arith.constant 0 : i32
    return %c0_i32, %c0_i32_0 : i32, i32
  }
  func.func @transform_23(%arg0: i32) -> (i32, i32) {
    %c0_i32 = arith.constant 0 : i32
    %c0_i32_0 = arith.constant 0 : i32
    %c0_i32_1 = arith.constant 0 : i32
    return %c0_i32, %c0_i32_0 : i32, i32
  }
  func.func @transform_24(%arg0: i32) -> (i32, i32) {
    %c0_i32 = arith.constant 0 : i32
    %c0_i32_0 = arith.constant 0 : i32
    %c0_i32_1 = arith.constant 0 : i32
    return %c0_i32, %c0_i32_0 : i32, i32
  }
}

</mosaic_0001>

<llo_original>
// kernel: student_bert_classifier_forward.1
$region0: #{student_bert_classifier_forward.1}
  #allocation0 [shape = 'u32[]', space=smem, size = 0x4, offset = 0x4, fixed_abs, tag = 'smem constant byte address 0x4 - core index']
  #allocation1 [shape = 'u32[144,128]{1,0:T(1,128)}', space=vmem, size = 0x12000, scoped, tag = 'internal scratch']
  #allocation2 [shape = 'f32[16,16]{1,0:T(8,128)}', space=vmem, size = 0x2000, scoped, tag = 'scratch operand']
  %s0 = inlined_call_operand.vmem [shape: f32[16,32], index: 0, kind: input, shape index: {}]
  %s1 = inlined_call_operand.vmem [shape: f32[16,1], index: 1, kind: input, shape index: {}]
  %s2 = inlined_call_operand.vmem [shape: f32[1,16], index: 2, kind: input, shape index: {}]
  %s3 = inlined_call_operand.vmem [shape: f32[1,32], index: 3, kind: input, shape index: {}]
  %s4 = inlined_call_operand.vmem [shape: f32[1,32], index: 4, kind: input, shape index: {}]
  %s5 = inlined_call_operand.vmem [shape: bf16[4,32], index: 5, kind: input, shape index: {}]
  %s6 = inlined_call_operand.vmem [shape: bf16[2,32,96], index: 6, kind: input, shape index: {}]
  %s7 = inlined_call_operand.vmem [shape: f32[2,1,96], index: 7, kind: input, shape index: {}]
  %s8 = inlined_call_operand.vmem [shape: bf16[2,32,32], index: 8, kind: input, shape index: {}]
  %s9 = inlined_call_operand.vmem [shape: f32[2,1,32], index: 9, kind: input, shape index: {}]
  %s10 = inlined_call_operand.vmem [shape: f32[2,1,32], index: 10, kind: input, shape index: {}]
  %s11 = inlined_call_operand.vmem [shape: f32[2,1,32], index: 11, kind: input, shape index: {}]
  %s12 = inlined_call_operand.vmem [shape: bf16[2,32,64], index: 12, kind: input, shape index: {}]
  %s13 = inlined_call_operand.vmem [shape: f32[2,1,64], index: 13, kind: input, shape index: {}]
  %s14 = inlined_call_operand.vmem [shape: bf16[2,64,32], index: 14, kind: input, shape index: {}]
  %s15 = inlined_call_operand.vmem [shape: f32[2,1,32], index: 15, kind: input, shape index: {}]
  %s16 = inlined_call_operand.vmem [shape: f32[2,1,32], index: 16, kind: input, shape index: {}]
  %s17 = inlined_call_operand.vmem [shape: f32[2,1,32], index: 17, kind: input, shape index: {}]
  %s18 = inlined_call_operand.vmem [shape: bf16[32,32], index: 18, kind: input, shape index: {}]
  %s19 = inlined_call_operand.vmem [shape: f32[1,32], index: 19, kind: input, shape index: {}]
  %s20 = inlined_call_operand.vmem [shape: bf16[32,128], index: 20, kind: input, shape index: {}]
  %s21 = inlined_call_operand.vmem [shape: f32[1,128], index: 21, kind: input, shape index: {}]
  %s22 = inlined_call_operand.hbm [shape: f32[16,32], index: 22, kind: output, shape index: {0}]
  %s23 = inlined_call_operand.hbm [shape: f32[2,32], index: 23, kind: output, shape index: {1}]
  %s24 = inlined_call_operand.hbm [shape: f32[2,128], index: 24, kind: output, shape index: {2}]
  %25 = xla_tuple %s22, %s23, %s24
  %s26 = sld [smem:[#allocation0]]
  $region145: #{student_bert_classifier_forward.1} parent=0
    _
  %s28 = ssub.s32 1, %s26
  %s29 = scalar_select 0, %s28, %s26
  $region1: #{student_bert_classifier_forward.1} parent=0
    #allocation3 [shape = 'u8[8192]{0}', space=vmem, size = 0x2000, scoped, tag = 'output window, operand 0, single buffered']
    #allocation4 [shape = 's32[2]{0}', space=sflag, size = 0x8, scoped, tag = 'scoped memory for student_bert_classifier_forward.1']
    #allocation5 [shape = 'u8[1024]{0}', space=vmem, size = 0x400, scoped, tag = 'output window, operand 1, single buffered']
    #allocation6 [shape = 's32[1]{0}', space=sflag, size = 0x4, scoped, tag = 'scoped memory for student_bert_classifier_forward.1']
    #allocation7 [shape = 'u8[1024]{0}', space=vmem, size = 0x400, scoped, tag = 'output window, operand 2, single buffered']
    %30 = vsyncpa [#allocation4], 0
    %31 = vsyncpa [#allocation6], 0
    loop: start=0, step=1, limit=4
    $region2: #{student_bert_classifier_forward.1} parent=1 // loop_pre_header
      _
    $region3: #{student_bert_classifier_forward.1} parent=1 // loop_header
      %s33 = sphi 0, %s37
      %p34 = scmp.ge.s32.totalorder %s33, 4
      %s41 = sphi 0, %s41
      %s43 = sphi 0, %s41
      %s44 = sphi 0, %s43
      %s58 = sphi 0, %s44
      %s62 = sphi 0, %s62
      %s64 = sphi 0, %s62
      %s65 = sphi 0, %s64
      %s79 = sphi 0, %s65
      %s83 = sphi 0, %s83
      %s85 = sphi 0, %s83
      %s86 = sphi 0, %s85
      %s100 = sphi 0, %s86
      %s104 = sphi 0, %s104
      %s106 = sphi 0, %s104
      %s107 = sphi 0, %s106
      %s121 = sphi 0, %s107
      %s125 = sphi 0, %s125
      %s127 = sphi 0, %s125
      %s128 = sphi 0, %s127
      %s142 = sphi 0, %s128
      %s146 = sphi 0, %s146
      %s148 = sphi 0, %s146
      %s149 = sphi 0, %s148
      %s163 = sphi 0, %s149
      %s169 = sphi 0, %s171
      %s172 = sphi 0, %s169
      %s173 = sphi 0, %s172
      %s189 = sphi 0, %s173
      %s195 = sphi 0, %s197
      %s198 = sphi 0, %s195
      %s199 = sphi 0, %s198
      %s215 = sphi 0, %s199
      %s221 = sphi 0, %s223
      %s224 = sphi 0, %s221
      %s225 = sphi 0, %s224
      %s241 = sphi 0, %s225
      %s247 = sphi 0, %s249
      %s250 = sphi 0, %s247
      %s251 = sphi 0, %s250
      %s267 = sphi 0, %s251
      %s273 = sphi 0, %s275
      %s276 = sphi 0, %s273
      %s277 = sphi 0, %s276
      %s293 = sphi 0, %s277
      %s299 = sphi 0, %s301
      %s302 = sphi 0, %s299
      %s303 = sphi 0, %s302
      %s319 = sphi 0, %s303
      %s325 = sphi 0, %s327
      %s328 = sphi 0, %s325
      %s329 = sphi 0, %s328
      %s345 = sphi 0, %s329
      %s351 = sphi 0, %s353
      %s354 = sphi 0, %s351
      %s355 = sphi 0, %s354
      %s371 = sphi 0, %s355
      %s377 = sphi 0, %s379
      %s380 = sphi 0, %s377
      %s381 = sphi 0, %s380
      %s397 = sphi 0, %s381
      %s403 = sphi 0, %s405
      %s406 = sphi 0, %s403
      %s407 = sphi 0, %s406
      %s423 = sphi 0, %s407
      %s429 = sphi 0, %s431
      %s432 = sphi 0, %s429
      %s433 = sphi 0, %s432
      %s449 = sphi 0, %s433
      %s455 = sphi 0, %s457
      %s458 = sphi 0, %s455
      %s459 = sphi 0, %s458
      %s475 = sphi 0, %s459
      %s479 = sphi 0, %s479
      %s481 = sphi 0, %s479
      %s482 = sphi 0, %s481
      %s496 = sphi 0, %s482
      %s500 = sphi 0, %s500
      %s502 = sphi 0, %s500
      %s503 = sphi 0, %s502
      %s517 = sphi 0, %s503
      %s521 = sphi 0, %s521
      %s523 = sphi 0, %s521
      %s524 = sphi 0, %s523
      %s538 = sphi 0, %s524
      %s542 = sphi 0, %s542
      %s544 = sphi 0, %s542
      %s545 = sphi 0, %s544
      %s559 = sphi 0, %s545
      %s563 = sphi 0, %s563
      %s565 = sphi 0, %s563
      %s566 = sphi 0, %s565
      %s580 = sphi 0, %s566
      %s584 = sphi 0, %s584
      %s586 = sphi 0, %s584
      %s587 = sphi 0, %s586
      %s601 = sphi 0, %s587
      %s605 = sphi 0, %s605
      %s607 = sphi 0, %s605
      %s608 = sphi 0, %s607
      %s622 = sphi 0, %s608
    $region4: #{student_bert_classifier_forward.1} parent=1 // loop_header_branch
      %36 = sbr.rel (%p34) target = $region8
    $region5: #{student_bert_classifier_forward.1} parent=1 // loop_body
      %s38 = ssub.s32 %s33, 1
      %s39 = ssub.s32 %s33, 2
      %s40 = sadd.s32 %s33, 1
      %s42 = sadd.s32 %s41, 1
      %p45 = scmp.eq.s32.totalorder %s33, 1
      %p46 = scmp.ne.s32.totalorder %s41, %s43
      %p47 = scmp.eq.s32.totalorder %s33, 0
      %p48 = por %p46, %p47
      %p49 = scmp.ne.s32.totalorder %s41, %s43
      %p50 = scmp.eq.s32.totalorder %s38, 1
      %p51 = por %p49, %p50
      %p52 = scmp.ne.s32.totalorder %s43, %s44
      %p53 = scmp.eq.s32.totalorder %s38, 0
      %p54 = por %p52, %p53
      %p55 = scmp.ne.s32.totalorder %s43, %s44
      %p56 = scmp.eq.s32.totalorder %s39, 1
      %p57 = por %p55, %p56
      %p59 = scmp.ne.s32.totalorder %s44, %s58
      %p60 = scmp.eq.s32.totalorder %s39, 0
      %p61 = por %p59, %p60
      %s63 = sadd.s32 %s62, 1
      %p66 = scmp.eq.s32.totalorder %s33, 1
      %p67 = scmp.ne.s32.totalorder %s62, %s64
      %p68 = scmp.eq.s32.totalorder %s33, 0
      %p69 = por %p67, %p68
      %p70 = scmp.ne.s32.totalorder %s62, %s64
      %p71 = scmp.eq.s32.totalorder %s38, 1
      %p72 = por %p70, %p71
      %p73 = scmp.ne.s32.totalorder %s64, %s65
      %p74 = scmp.eq.s32.totalorder %s38, 0
      %p75 = por %p73, %p74
      %p76 = scmp.ne.s32.totalorder %s64, %s65
      %p77 = scmp.eq.s32.totalorder %s39, 1
      %p78 = por %p76, %p77
      %p80 = scmp.ne.s32.totalorder %s65, %s79
      %p81 = scmp.eq.s32.totalorder %s39, 0
      %p82 = por %p80, %p81
      %s84 = sadd.s32 %s83, 1
      %p87 = scmp.eq.s32.totalorder %s33, 1
      %p88 = scmp.ne.s32.totalorder %s83, %s85
      %p89 = scmp.eq.s32.totalorder %s33, 0
      %p90 = por %p88, %p89
      %p91 = scmp.ne.s32.totalorder %s83, %s85
      %p92 = scmp.eq.s32.totalorder %s38, 1
      %p93 = por %p91, %p92
      %p94 = scmp.ne.s32.totalorder %s85, %s86
      %p95 = scmp.eq.s32.totalorder %s38, 0
      %p96 = por %p94, %p95
      %p97 = scmp.ne.s32.totalorder %s85, %s86
      %p98 = scmp.eq.s32.totalorder %s39, 1
      %p99 = por %p97, %p98
      %p101 = scmp.ne.s32.totalorder %s86, %s100
      %p102 = scmp.eq.s32.totalorder %s39, 0
      %p103 = por %p101, %p102
      %s105 = sadd.s32 %s104, 1
      %p108 = scmp.eq.s32.totalorder %s33, 1
      %p109 = scmp.ne.s32.totalorder %s104, %s106
      %p110 = scmp.eq.s32.totalorder %s33, 0
      %p111 = por %p109, %p110
      %p112 = scmp.ne.s32.totalorder %s104, %s106
      %p113 = scmp.eq.s32.totalorder %s38, 1
      %p114 = por %p112, %p113
      %p115 = scmp.ne.s32.totalorder %s106, %s107
      %p116 = scmp.eq.s32.totalorder %s38, 0
      %p117 = por %p115, %p116
      %p118 = scmp.ne.s32.totalorder %s106, %s107
      %p119 = scmp.eq.s32.totalorder %s39, 1
      %p120 = por %p118, %p119
      %p122 = scmp.ne.s32.totalorder %s107, %s121
      %p123 = scmp.eq.s32.totalorder %s39, 0
      %p124 = por %p122, %p123
      %s126 = sadd.s32 %s125, 1
      %p129 = scmp.eq.s32.totalorder %s33, 1
      %p130 = scmp.ne.s32.totalorder %s125, %s127
      %p131 = scmp.eq.s32.totalorder %s33, 0
      %p132 = por %p130, %p131
      %p133 = scmp.ne.s32.totalorder %s125, %s127
      %p134 = scmp.eq.s32.totalorder %s38, 1
      %p135 = por %p133, %p134
      %p136 = scmp.ne.s32.totalorder %s127, %s128
      %p137 = scmp.eq.s32.totalorder %s38, 0
      %p138 = por %p136, %p137
      %p139 = scmp.ne.s32.totalorder %s127, %s128
      %p140 = scmp.eq.s32.totalorder %s39, 1
      %p141 = por %p139, %p140
      %p143 = scmp.ne.s32.totalorder %s128, %s142
      %p144 = scmp.eq.s32.totalorder %s39, 0
      %p145 = por %p143, %p144
      %s147 = sadd.s32 %s146, 1
      %p150 = scmp.eq.s32.totalorder %s33, 1
      %p151 = scmp.ne.s32.totalorder %s146, %s148
      %p152 = scmp.eq.s32.totalorder %s33, 0
      %p153 = por %p151, %p152
      %p154 = scmp.ne.s32.totalorder %s146, %s148
      %p155 = scmp.eq.s32.totalorder %s38, 1
      %p156 = por %p154, %p155
      %p157 = scmp.ne.s32.totalorder %s148, %s149
      %p158 = scmp.eq.s32.totalorder %s38, 0
      %p159 = por %p157, %p158
      %p160 = scmp.ne.s32.totalorder %s148, %s149
      %p161 = scmp.eq.s32.totalorder %s39, 1
      %p162 = por %p160, %p161
      %p164 = scmp.ne.s32.totalorder %s149, %s163
      %p165 = scmp.eq.s32.totalorder %s39, 0
      %p166 = por %p164, %p165
      %s167 = ssub.s32 %s33, %s40
      %p168 = scmp.eq.s32.totalorder %s167, 0
      %s170 = sadd.s32 %s169, 1
      %s171 = scalar_select %p168, %s169, %s170
      %p174 = pneg %p168
      %p175 = scmp.eq.s32.totalorder %s33, 1
      %p176 = por %p174, %p175
      %p177 = scmp.ne.s32.totalorder %s169, %s172
      %p178 = scmp.eq.s32.totalorder %s33, 0
      %p179 = por %p177, %p178
      %p180 = scmp.ne.s32.totalorder %s169, %s172
      %p181 = scmp.eq.s32.totalorder %s38, 1
      %p182 = por %p180, %p181
      %p183 = scmp.ne.s32.totalorder %s172, %s173
      %p184 = scmp.eq.s32.totalorder %s38, 0
      %p185 = por %p183, %p184
      %p186 = scmp.ne.s32.totalorder %s172, %s173
      %p187 = scmp.eq.s32.totalorder %s39, 1
      %p188 = por %p186, %p187
      %p190 = scmp.ne.s32.totalorder %s173, %s189
      %p191 = scmp.eq.s32.totalorder %s39, 0
      %p192 = por %p190, %p191
      %s193 = ssub.s32 %s33, %s40
      %p194 = scmp.eq.s32.totalorder %s193, 0
      %s196 = sadd.s32 %s195, 1
      %s197 = scalar_select %p194, %s195, %s196
      %p200 = pneg %p194
      %p201 = scmp.eq.s32.totalorder %s33, 1
      %p202 = por %p200, %p201
      %p203 = scmp.ne.s32.totalorder %s195, %s198
      %p204 = scmp.eq.s32.totalorder %s33, 0
      %p205 = por %p203, %p204
      %p206 = scmp.ne.s32.totalorder %s195, %s198
      %p207 = scmp.eq.s32.totalorder %s38, 1
      %p208 = por %p206, %p207
      %p209 = scmp.ne.s32.totalorder %s198, %s199
      %p210 = scmp.eq.s32.totalorder %s38, 0
      %p211 = por %p209, %p210
      %p212 = scmp.ne.s32.totalorder %s198, %s199
      %p213 = scmp.eq.s32.totalorder %s39, 1
      %p214 = por %p212, %p213
      %p216 = scmp.ne.s32.totalorder %s199, %s215
      %p217 = scmp.eq.s32.totalorder %s39, 0
      %p218 = por %p216, %p217
      %s219 = ssub.s32 %s33, %s40
      %p220 = scmp.eq.s32.totalorder %s219, 0
      %s222 = sadd.s32 %s221, 1
      %s223 = scalar_select %p220, %s221, %s222
      %p226 = pneg %p220
      %p227 = scmp.eq.s32.totalorder %s33, 1
      %p228 = por %p226, %p227
      %p229 = scmp.ne.s32.totalorder %s221, %s224
      %p230 = scmp.eq.s32.totalorder %s33, 0
      %p231 = por %p229, %p230
      %p232 = scmp.ne.s32.totalorder %s221, %s224
      %p233 = scmp.eq.s32.totalorder %s38, 1
      %p234 = por %p232, %p233
      %p235 = scmp.ne.s32.totalorder %s224, %s225
      %p236 = scmp.eq.s32.totalorder %s38, 0
      %p237 = por %p235, %p236
      %p238 = scmp.ne.s32.totalorder %s224, %s225
      %p239 = scmp.eq.s32.totalorder %s39, 1
      %p240 = por %p238, %p239
      %p242 = scmp.ne.s32.totalorder %s225, %s241
      %p243 = scmp.eq.s32.totalorder %s39, 0
      %p244 = por %p242, %p243
      %s245 = ssub.s32 %s33, %s40
      %p246 = scmp.eq.s32.totalorder %s245, 0
      %s248 = sadd.s32 %s247, 1
      %s249 = scalar_select %p246, %s247, %s248
      %p252 = pneg %p246
      %p253 = scmp.eq.s32.totalorder %s33, 1
      %p254 = por %p252, %p253
      %p255 = scmp.ne.s32.totalorder %s247, %s250
      %p256 = scmp.eq.s32.totalorder %s33, 0
      %p257 = por %p255, %p256
      %p258 = scmp.ne.s32.totalorder %s247, %s250
      %p259 = scmp.eq.s32.totalorder %s38, 1
      %p260 = por %p258, %p259
      %p261 = scmp.ne.s32.totalorder %s250, %s251
      %p262 = scmp.eq.s32.totalorder %s38, 0
      %p263 = por %p261, %p262
      %p264 = scmp.ne.s32.totalorder %s250, %s251
      %p265 = scmp.eq.s32.totalorder %s39, 1
      %p266 = por %p264, %p265
      %p268 = scmp.ne.s32.totalorder %s251, %s267
      %p269 = scmp.eq.s32.totalorder %s39, 0
      %p270 = por %p268, %p269
      %s271 = ssub.s32 %s33, %s40
      %p272 = scmp.eq.s32.totalorder %s271, 0
      %s274 = sadd.s32 %s273, 1
      %s275 = scalar_select %p272, %s273, %s274
      %p278 = pneg %p272
      %p279 = scmp.eq.s32.totalorder %s33, 1
      %p280 = por %p278, %p279
      %p281 = scmp.ne.s32.totalorder %s273, %s276
      %p282 = scmp.eq.s32.totalorder %s33, 0
      %p283 = por %p281, %p282
      %p284 = scmp.ne.s32.totalorder %s273, %s276
      %p285 = scmp.eq.s32.totalorder %s38, 1
      %p286 = por %p284, %p285
      %p287 = scmp.ne.s32.totalorder %s276, %s277
      %p288 = scmp.eq.s32.totalorder %s38, 0
      %p289 = por %p287, %p288
      %p290 = scmp.ne.s32.totalorder %s276, %s277
      %p291 = scmp.eq.s32.totalorder %s39, 1
      %p292 = por %p290, %p291
      %p294 = scmp.ne.s32.totalorder %s277, %s293
      %p295 = scmp.eq.s32.totalorder %s39, 0
      %p296 = por %p294, %p295
      %s297 = ssub.s32 %s33, %s40
      %p298 = scmp.eq.s32.totalorder %s297, 0
      %s300 = sadd.s32 %s299, 1
      %s301 = scalar_select %p298, %s299, %s300
      %p304 = pneg %p298
      %p305 = scmp.eq.s32.totalorder %s33, 1
      %p306 = por %p304, %p305
      %p307 = scmp.ne.s32.totalorder %s299, %s302
      %p308 = scmp.eq.s32.totalorder %s33, 0
      %p309 = por %p307, %p308
      %p310 = scmp.ne.s32.totalorder %s299, %s302
      %p311 = scmp.eq.s32.totalorder %s38, 1
      %p312 = por %p310, %p311
      %p313 = scmp.ne.s32.totalorder %s302, %s303
      %p314 = scmp.eq.s32.totalorder %s38, 0
      %p315 = por %p313, %p314
      %p316 = scmp.ne.s32.totalorder %s302, %s303
      %p317 = scmp.eq.s32.totalorder %s39, 1
      %p318 = por %p316, %p317
      %p320 = scmp.ne.s32.totalorder %s303, %s319
      %p321 = scmp.eq.s32.totalorder %s39, 0
      %p322 = por %p320, %p321
      %s323 = ssub.s32 %s33, %s40
      %p324 = scmp.eq.s32.totalorder %s323, 0
      %s326 = sadd.s32 %s325, 1
      %s327 = scalar_select %p324, %s325, %s326
      %p330 = pneg %p324
      %p331 = scmp.eq.s32.totalorder %s33, 1
      %p332 = por %p330, %p331
      %p333 = scmp.ne.s32.totalorder %s325, %s328
      %p334 = scmp.eq.s32.totalorder %s33, 0
      %p335 = por %p333, %p334
      %p336 = scmp.ne.s32.totalorder %s325, %s328
      %p337 = scmp.eq.s32.totalorder %s38, 1
      %p338 = por %p336, %p337
      %p339 = scmp.ne.s32.totalorder %s328, %s329
      %p340 = scmp.eq.s32.totalorder %s38, 0
      %p341 = por %p339, %p340
      %p342 = scmp.ne.s32.totalorder %s328, %s329
      %p343 = scmp.eq.s32.totalorder %s39, 1
      %p344 = por %p342, %p343
      %p346 = scmp.ne.s32.totalorder %s329, %s345
      %p347 = scmp.eq.s32.totalorder %s39, 0
      %p348 = por %p346, %p347
      %s349 = ssub.s32 %s33, %s40
      %p350 = scmp.eq.s32.totalorder %s349, 0
      %s352 = sadd.s32 %s351, 1
      %s353 = scalar_select %p350, %s351, %s352
      %p356 = pneg %p350
      %p357 = scmp.eq.s32.totalorder %s33, 1
      %p358 = por %p356, %p357
      %p359 = scmp.ne.s32.totalorder %s351, %s354
      %p360 = scmp.eq.s32.totalorder %s33, 0
      %p361 = por %p359, %p360
      %p362 = scmp.ne.s32.totalorder %s351, %s354
      %p363 = scmp.eq.s32.totalorder %s38, 1
      %p364 = por %p362, %p363
      %p365 = scmp.ne.s32.totalorder %s354, %s355
      %p366 = scmp.eq.s32.totalorder %s38, 0
      %p367 = por %p365, %p366
      %p368 = scmp.ne.s32.totalorder %s354, %s355
      %p369 = scmp.eq.s32.totalorder %s39, 1
      %p370 = por %p368, %p369
      %p372 = scmp.ne.s32.totalorder %s355, %s371
      %p373 = scmp.eq.s32.totalorder %s39, 0
      %p374 = por %p372, %p373
      %s375 = ssub.s32 %s33, %s40
      %p376 = scmp.eq.s32.totalorder %s375, 0
      %s378 = sadd.s32 %s377, 1
      %s379 = scalar_select %p376, %s377, %s378
      %p382 = pneg %p376
      %p383 = scmp.eq.s32.totalorder %s33, 1
      %p384 = por %p382, %p383
      %p385 = scmp.ne.s32.totalorder %s377, %s380
      %p386 = scmp.eq.s32.totalorder %s33, 0
      %p387 = por %p385, %p386
      %p388 = scmp.ne.s32.totalorder %s377, %s380
      %p389 = scmp.eq.s32.totalorder %s38, 1
      %p390 = por %p388, %p389
      %p391 = scmp.ne.s32.totalorder %s380, %s381
      %p392 = scmp.eq.s32.totalorder %s38, 0
      %p393 = por %p391, %p392
      %p394 = scmp.ne.s32.totalorder %s380, %s381
      %p395 = scmp.eq.s32.totalorder %s39, 1
      %p396 = por %p394, %p395
      %p398 = scmp.ne.s32.totalorder %s381, %s397
      %p399 = scmp.eq.s32.totalorder %s39, 0
      %p400 = por %p398, %p399
      %s401 = ssub.s32 %s33, %s40
      %p402 = scmp.eq.s32.totalorder %s401, 0
      %s404 = sadd.s32 %s403, 1
      %s405 = scalar_select %p402, %s403, %s404
      %p408 = pneg %p402
      %p409 = scmp.eq.s32.totalorder %s33, 1
      %p410 = por %p408, %p409
      %p411 = scmp.ne.s32.totalorder %s403, %s406
      %p412 = scmp.eq.s32.totalorder %s33, 0
      %p413 = por %p411, %p412
      %p414 = scmp.ne.s32.totalorder %s403, %s406
      %p415 = scmp.eq.s32.totalorder %s38, 1
      %p416 = por %p414, %p415
      %p417 = scmp.ne.s32.totalorder %s406, %s407
      %p418 = scmp.eq.s32.totalorder %s38, 0
      %p419 = por %p417, %p418
      %p420 = scmp.ne.s32.totalorder %s406, %s407
      %p421 = scmp.eq.s32.totalorder %s39, 1
      %p422 = por %p420, %p421
      %p424 = scmp.ne.s32.totalorder %s407, %s423
      %p425 = scmp.eq.s32.totalorder %s39, 0
      %p426 = por %p424, %p425
      %s427 = ssub.s32 %s33, %s40
      %p428 = scmp.eq.s32.totalorder %s427, 0
      %s430 = sadd.s32 %s429, 1
      %s431 = scalar_select %p428, %s429, %s430
      %p434 = pneg %p428
      %p435 = scmp.eq.s32.totalorder %s33, 1
      %p436 = por %p434, %p435
      %p437 = scmp.ne.s32.totalorder %s429, %s432
      %p438 = scmp.eq.s32.totalorder %s33, 0
      %p439 = por %p437, %p438
      %p440 = scmp.ne.s32.totalorder %s429, %s432
      %p441 = scmp.eq.s32.totalorder %s38, 1
      %p442 = por %p440, %p441
      %p443 = scmp.ne.s32.totalorder %s432, %s433
      %p444 = scmp.eq.s32.totalorder %s38, 0
      %p445 = por %p443, %p444
      %p446 = scmp.ne.s32.totalorder %s432, %s433
      %p447 = scmp.eq.s32.totalorder %s39, 1
      %p448 = por %p446, %p447
      %p450 = scmp.ne.s32.totalorder %s433, %s449
      %p451 = scmp.eq.s32.totalorder %s39, 0
      %p452 = por %p450, %p451
      %s453 = ssub.s32 %s33, %s40
      %p454 = scmp.eq.s32.totalorder %s453, 0
      %s456 = sadd.s32 %s455, 1
      %s457 = scalar_select %p454, %s455, %s456
      %p460 = pneg %p454
      %p461 = scmp.eq.s32.totalorder %s33, 1
      %p462 = por %p460, %p461
      %p463 = scmp.ne.s32.totalorder %s455, %s458
      %p464 = scmp.eq.s32.totalorder %s33, 0
      %p465 = por %p463, %p464
      %p466 = scmp.ne.s32.totalorder %s455, %s458
      %p467 = scmp.eq.s32.totalorder %s38, 1
      %p468 = por %p466, %p467
      %p469 = scmp.ne.s32.totalorder %s458, %s459
      %p470 = scmp.eq.s32.totalorder %s38, 0
      %p471 = por %p469, %p470
      %p472 = scmp.ne.s32.totalorder %s458, %s459
      %p473 = scmp.eq.s32.totalorder %s39, 1
      %p474 = por %p472, %p473
      %p476 = scmp.ne.s32.totalorder %s459, %s475
      %p477 = scmp.eq.s32.totalorder %s39, 0
      %p478 = por %p476, %p477
      %s480 = sadd.s32 %s479, 1
      %p483 = scmp.eq.s32.totalorder %s33, 1
      %p484 = scmp.ne.s32.totalorder %s479, %s481
      %p485 = scmp.eq.s32.totalorder %s33, 0
      %p486 = por %p484, %p485
      %p487 = scmp.ne.s32.totalorder %s479, %s481
      %p488 = scmp.eq.s32.totalorder %s38, 1
      %p489 = por %p487, %p488
      %p490 = scmp.ne.s32.totalorder %s481, %s482
      %p491 = scmp.eq.s32.totalorder %s38, 0
      %p492 = por %p490, %p491
      %p493 = scmp.ne.s32.totalorder %s481, %s482
      %p494 = scmp.eq.s32.totalorder %s39, 1
      %p495 = por %p493, %p494
      %p497 = scmp.ne.s32.totalorder %s482, %s496
      %p498 = scmp.eq.s32.totalorder %s39, 0
      %p499 = por %p497, %p498
      %s501 = sadd.s32 %s500, 1
      %p504 = scmp.eq.s32.totalorder %s33, 1
      %p505 = scmp.ne.s32.totalorder %s500, %s502
      %p506 = scmp.eq.s32.totalorder %s33, 0
      %p507 = por %p505, %p506
      %p508 = scmp.ne.s32.totalorder %s500, %s502
      %p509 = scmp.eq.s32.totalorder %s38, 1
      %p510 = por %p508, %p509
      %p511 = scmp.ne.s32.totalorder %s502, %s503
      %p512 = scmp.eq.s32.totalorder %s38, 0
      %p513 = por %p511, %p512
      %p514 = scmp.ne.s32.totalorder %s502, %s503
      %p515 = scmp.eq.s32.totalorder %s39, 1
      %p516 = por %p514, %p515
      %p518 = scmp.ne.s32.totalorder %s503, %s517
      %p519 = scmp.eq.s32.totalorder %s39, 0
      %p520 = por %p518, %p519
      %s522 = sadd.s32 %s521, 1
      %p525 = scmp.eq.s32.totalorder %s33, 1
      %p526 = scmp.ne.s32.totalorder %s521, %s523
      %p527 = scmp.eq.s32.totalorder %s33, 0
      %p528 = por %p526, %p527
      %p529 = scmp.ne.s32.totalorder %s521, %s523
      %p530 = scmp.eq.s32.totalorder %s38, 1
      %p531 = por %p529, %p530
      %p532 = scmp.ne.s32.totalorder %s523, %s524
      %p533 = scmp.eq.s32.totalorder %s38, 0
      %p534 = por %p532, %p533
      %p535 = scmp.ne.s32.totalorder %s523, %s524
      %p536 = scmp.eq.s32.totalorder %s39, 1
      %p537 = por %p535, %p536
      %p539 = scmp.ne.s32.totalorder %s524, %s538
      %p540 = scmp.eq.s32.totalorder %s39, 0
      %p541 = por %p539, %p540
      %s543 = sadd.s32 %s542, 1
      %p546 = scmp.eq.s32.totalorder %s33, 1
      %p547 = scmp.ne.s32.totalorder %s542, %s544
      %p548 = scmp.eq.s32.totalorder %s33, 0
      %p549 = por %p547, %p548
      %p550 = scmp.ne.s32.totalorder %s542, %s544
      %p551 = scmp.eq.s32.totalorder %s38, 1
      %p552 = por %p550, %p551
      %p553 = scmp.ne.s32.totalorder %s544, %s545
      %p554 = scmp.eq.s32.totalorder %s38, 0
      %p555 = por %p553, %p554
      %p556 = scmp.ne.s32.totalorder %s544, %s545
      %p557 = scmp.eq.s32.totalorder %s39, 1
      %p558 = por %p556, %p557
      %p560 = scmp.ne.s32.totalorder %s545, %s559
      %p561 = scmp.eq.s32.totalorder %s39, 0
      %p562 = por %p560, %p561
      %s564 = sadd.s32 %s563, 1
      %p567 = scmp.eq.s32.totalorder %s33, 1
      %p568 = scmp.ne.s32.totalorder %s563, %s565
      %p569 = scmp.eq.s32.totalorder %s33, 0
      %p570 = por %p568, %p569
      %p571 = scmp.ne.s32.totalorder %s563, %s565
      %p572 = scmp.eq.s32.totalorder %s38, 1
      %p573 = por %p571, %p572
      %p574 = scmp.ne.s32.totalorder %s565, %s566
      %p575 = scmp.eq.s32.totalorder %s38, 0
      %p576 = por %p574, %p575
      %p577 = scmp.ne.s32.totalorder %s565, %s566
      %p578 = scmp.eq.s32.totalorder %s39, 1
      %p579 = por %p577, %p578
      %p581 = scmp.ne.s32.totalorder %s566, %s580
      %p582 = scmp.eq.s32.totalorder %s39, 0
      %p583 = por %p581, %p582
      %s585 = sadd.s32 %s584, 1
      %p588 = scmp.eq.s32.totalorder %s33, 1
      %p589 = scmp.ne.s32.totalorder %s584, %s586
      %p590 = scmp.eq.s32.totalorder %s33, 0
      %p591 = por %p589, %p590
      %p592 = scmp.ne.s32.totalorder %s584, %s586
      %p593 = scmp.eq.s32.totalorder %s38, 1
      %p594 = por %p592, %p593
      %p595 = scmp.ne.s32.totalorder %s586, %s587
      %p596 = scmp.eq.s32.totalorder %s38, 0
      %p597 = por %p595, %p596
      %p598 = scmp.ne.s32.totalorder %s586, %s587
      %p599 = scmp.eq.s32.totalorder %s39, 1
      %p600 = por %p598, %p599
      %p602 = scmp.ne.s32.totalorder %s587, %s601
      %p603 = scmp.eq.s32.totalorder %s39, 0
      %p604 = por %p602, %p603
      %s606 = sadd.s32 %s605, 1
      %p609 = scmp.eq.s32.totalorder %s33, 1
      %p610 = scmp.ne.s32.totalorder %s605, %s607
      %p611 = scmp.eq.s32.totalorder %s33, 0
      %p612 = por %p610, %p611
      %p613 = scmp.ne.s32.totalorder %s605, %s607
      %p614 = scmp.eq.s32.totalorder %s38, 1
      %p615 = por %p613, %p614
      %p616 = scmp.ne.s32.totalorder %s607, %s608
      %p617 = scmp.eq.s32.totalorder %s38, 0
      %p618 = por %p616, %p617
      %p619 = scmp.ne.s32.totalorder %s607, %s608
      %p620 = scmp.eq.s32.totalorder %s39, 1
      %p621 = por %p619, %p620
      %p623 = scmp.ne.s32.totalorder %s608, %s622
      %p624 = scmp.eq.s32.totalorder %s39, 0
      %p625 = por %p623, %p624
      %p626 = scmp.le.s32.totalorder 1, %s33
      %p627 = scmp.lt.s32.totalorder %s33, 3
      %p628 = pnand %p626, %p627
      %p629 = pneg %p628
      // Predicated region
      $region9: #{student_bert_classifier_forward.1} parent=5 // pred_check
        _
      $region10: #{student_bert_classifier_forward.1} parent=5 // pred_check_branch
        %631 = sbr.rel (%p628) target = $region12
      $region11: #{student_bert_classifier_forward.1} parent=5 // pred_region
        %s632 = ssub.s32 %s33, 1
        // Predicated region
        $region13: #{student_bert_classifier_forward.1} parent=11 // pred_check
          %p633 = pneg %p54
        $region14: #{student_bert_classifier_forward.1} parent=11 // pred_check_branch
          %635 = sbr.rel (%p633) target = $region16
        $region15: #{student_bert_classifier_forward.1} parent=11 // pred_region
          _
        $region16: #{student_bert_classifier_forward.1} parent=11 // pred_fallthru
          _
        // Predicated region
        $region17: #{student_bert_classifier_forward.1} parent=11 // pred_check
          %p636 = pneg %p75
        $region18: #{student_bert_classifier_forward.1} parent=11 // pred_check_branch
          %638 = sbr.rel (%p636) target = $region20
        $region19: #{student_bert_classifier_forward.1} parent=11 // pred_region
          _
        $region20: #{student_bert_classifier_forward.1} parent=11 // pred_fallthru
          _
        // Predicated region
        $region21: #{student_bert_classifier_forward.1} parent=11 // pred_check
          %p639 = pneg %p96
        $region22: #{student_bert_classifier_forward.1} parent=11 // pred_check_branch
          %641 = sbr.rel (%p639) target = $region24
        $region23: #{student_bert_classifier_forward.1} parent=11 // pred_region
          _
        $region24: #{student_bert_classifier_forward.1} parent=11 // pred_fallthru
          _
        // Predicated region
        $region25: #{student_bert_classifier_forward.1} parent=11 // pred_check
          %p642 = pneg %p117
        $region26: #{student_bert_classifier_forward.1} parent=11 // pred_check_branch
          %644 = sbr.rel (%p642) target = $region28
        $region27: #{student_bert_classifier_forward.1} parent=11 // pred_region
          _
        $region28: #{student_bert_classifier_forward.1} parent=11 // pred_fallthru
          _
        // Predicated region
        $region29: #{student_bert_classifier_forward.1} parent=11 // pred_check
          %p645 = pneg %p138
        $region30: #{student_bert_classifier_forward.1} parent=11 // pred_check_branch
          %647 = sbr.rel (%p645) target = $region32
        $region31: #{student_bert_classifier_forward.1} parent=11 // pred_region
          _
        $region32: #{student_bert_classifier_forward.1} parent=11 // pred_fallthru
          _
        // Predicated region
        $region33: #{student_bert_classifier_forward.1} parent=11 // pred_check
          %p648 = pneg %p159
        $region34: #{student_bert_classifier_forward.1} parent=11 // pred_check_branch
          %650 = sbr.rel (%p648) target = $region36
        $region35: #{student_bert_classifier_forward.1} parent=11 // pred_region
          _
        $region36: #{student_bert_classifier_forward.1} parent=11 // pred_fallthru
          _
        // Predicated region
        $region37: #{student_bert_classifier_forward.1} parent=11 // pred_check
          %p651 = pneg %p492
        $region38: #{student_bert_classifier_forward.1} parent=11 // pred_check_branch
          %653 = sbr.rel (%p651) target = $region40
        $region39: #{student_bert_classifier_forward.1} parent=11 // pred_region
          _
        $region40: #{student_bert_classifier_forward.1} parent=11 // pred_fallthru
          _
        // Predicated region
        $region41: #{student_bert_classifier_forward.1} parent=11 // pred_check
          %p654 = pneg %p513
        $region42: #{student_bert_classifier_forward.1} parent=11 // pred_check_branch
          %656 = sbr.rel (%p654) target = $region44
        $region43: #{student_bert_classifier_forward.1} parent=11 // pred_region
          _
        $region44: #{student_bert_classifier_forward.1} parent=11 // pred_fallthru
          _
        // Predicated region
        $region45: #{student_bert_classifier_forward.1} parent=11 // pred_check
          %p657 = pneg %p534
        $region46: #{student_bert_classifier_forward.1} parent=11 // pred_check_branch
          %659 = sbr.rel (%p657) target = $region48
        $region47: #{student_bert_classifier_forward.1} parent=11 // pred_region
          _
        $region48: #{student_bert_classifier_forward.1} parent=11 // pred_fallthru
          _
        // Predicated region
        $region49: #{student_bert_classifier_forward.1} parent=11 // pred_check
          %p660 = pneg %p555
        $region50: #{student_bert_classifier_forward.1} parent=11 // pred_check_branch
          %662 = sbr.rel (%p660) target = $region52
        $region51: #{student_bert_classifier_forward.1} parent=11 // pred_region
          _
        $region52: #{student_bert_classifier_forward.1} parent=11 // pred_fallthru
          _
      $region12: #{student_bert_classifier_forward.1} parent=5 // pred_fallthru
        _
      %p663 = scmp.lt.s32.totalorder %s33, 2
      // Predicated region
      $region53: #{student_bert_classifier_forward.1} parent=5 // pred_check
        %p664 = pneg %p663
      $region54: #{student_bert_classifier_forward.1} parent=5 // pred_check_branch
        %666 = sbr.rel (%p664) target = $region56
      $region55: #{student_bert_classifier_forward.1} parent=5 // pred_region
        // Predicated region
        $region57: #{student_bert_classifier_forward.1} parent=55 // pred_check
          %p667 = pneg %p179
        $region58: #{student_bert_classifier_forward.1} parent=55 // pred_check_branch
          %669 = sbr.rel (%p667) target = $region60
        $region59: #{student_bert_classifier_forward.1} parent=55 // pred_region
          %p670 = scmp.lt.s32.totalorder %s33, 1
          %s671 = scalar_select %p670, %s33, 1
          %s672 = smul.addr %s671, 4
          %s673 = smul.addr %s672, 4
          %s674 = scalar_lea.vmem %s6, %s673
        $region60: #{student_bert_classifier_forward.1} parent=55 // pred_fallthru
          _
        // Predicated region
        $region61: #{student_bert_classifier_forward.1} parent=55 // pred_check
          %p675 = pneg %p205
        $region62: #{student_bert_classifier_forward.1} parent=55 // pred_check_branch
          %677 = sbr.rel (%p675) target = $region64
        $region63: #{student_bert_classifier_forward.1} parent=55 // pred_region
          %p678 = scmp.lt.s32.totalorder %s33, 1
          %s679 = scalar_select %p678, %s33, 1
          %s680 = scalar_lea.vmem %s7, %s679
        $region64: #{student_bert_classifier_forward.1} parent=55 // pred_fallthru
          _
        // Predicated region
        $region65: #{student_bert_classifier_forward.1} parent=55 // pred_check
          %p681 = pneg %p231
        $region66: #{student_bert_classifier_forward.1} parent=55 // pred_check_branch
          %683 = sbr.rel (%p681) target = $region68
        $region67: #{student_bert_classifier_forward.1} parent=55 // pred_region
          %p684 = scmp.lt.s32.totalorder %s33, 1
          %s685 = scalar_select %p684, %s33, 1
          %s686 = smul.addr %s685, 4
          %s687 = smul.addr %s686, 4
          %s688 = scalar_lea.vmem %s8, %s687
        $region68: #{student_bert_classifier_forward.1} parent=55 // pred_fallthru
          _
        // Predicated region
        $region69: #{student_bert_classifier_forward.1} parent=55 // pred_check
          %p689 = pneg %p257
        $region70: #{student_bert_classifier_forward.1} parent=55 // pred_check_branch
          %691 = sbr.rel (%p689) target = $region72
        $region71: #{student_bert_classifier_forward.1} parent=55 // pred_region
          %p692 = scmp.lt.s32.totalorder %s33, 1
          %s693 = scalar_select %p692, %s33, 1
          %s694 = scalar_lea.vmem %s9, %s693
        $region72: #{student_bert_classifier_forward.1} parent=55 // pred_fallthru
          _
        // Predicated region
        $region73: #{student_bert_classifier_forward.1} parent=55 // pred_check
          %p695 = pneg %p283
        $region74: #{student_bert_classifier_forward.1} parent=55 // pred_check_branch
          %697 = sbr.rel (%p695) target = $region76
        $region75: #{student_bert_classifier_forward.1} parent=55 // pred_region
          %p698 = scmp.lt.s32.totalorder %s33, 1
          %s699 = scalar_select %p698, %s33, 1
          %s700 = scalar_lea.vmem %s10, %s699
        $region76: #{student_bert_classifier_forward.1} parent=55 // pred_fallthru
          _
        // Predicated region
        $region77: #{student_bert_classifier_forward.1} parent=55 // pred_check
          %p701 = pneg %p309
        $region78: #{student_bert_classifier_forward.1} parent=55 // pred_check_branch
          %703 = sbr.rel (%p701) target = $region80
        $region79: #{student_bert_classifier_forward.1} parent=55 // pred_region
          %p704 = scmp.lt.s32.totalorder %s33, 1
          %s705 = scalar_select %p704, %s33, 1
          %s706 = scalar_lea.vmem %s11, %s705
        $region80: #{student_bert_classifier_forward.1} parent=55 // pred_fallthru
          _
        // Predicated region
        $region81: #{student_bert_classifier_forward.1} parent=55 // pred_check
          %p707 = pneg %p335
        $region82: #{student_bert_classifier_forward.1} parent=55 // pred_check_branch
          %709 = sbr.rel (%p707) target = $region84
        $region83: #{student_bert_classifier_forward.1} parent=55 // pred_region
          %p710 = scmp.lt.s32.totalorder %s33, 1
          %s711 = scalar_select %p710, %s33, 1
          %s712 = smul.addr %s711, 4
          %s713 = smul.addr %s712, 4
          %s714 = scalar_lea.vmem %s12, %s713
        $region84: #{student_bert_classifier_forward.1} parent=55 // pred_fallthru
          _
        // Predicated region
        $region85: #{student_bert_classifier_forward.1} parent=55 // pred_check
          %p715 = pneg %p361
        $region86: #{student_bert_classifier_forward.1} parent=55 // pred_check_branch
          %717 = sbr.rel (%p715) target = $region88
        $region87: #{student_bert_classifier_forward.1} parent=55 // pred_region
          %p718 = scmp.lt.s32.totalorder %s33, 1
          %s719 = scalar_select %p718, %s33, 1
          %s720 = scalar_lea.vmem %s13, %s719
        $region88: #{student_bert_classifier_forward.1} parent=55 // pred_fallthru
          _
        // Predicated region
        $region89: #{student_bert_classifier_forward.1} parent=55 // pred_check
          %p721 = pneg %p387
        $region90: #{student_bert_classifier_forward.1} parent=55 // pred_check_branch
          %723 = sbr.rel (%p721) target = $region92
        $region91: #{student_bert_classifier_forward.1} parent=55 // pred_region
          %p724 = scmp.lt.s32.totalorder %s33, 1
          %s725 = scalar_select %p724, %s33, 1
          %s726 = smul.addr %s725, 8
          %s727 = smul.addr %s726, 4
          %s728 = scalar_lea.vmem %s14, %s727
        $region92: #{student_bert_classifier_forward.1} parent=55 // pred_fallthru
          _
        // Predicated region
        $region93: #{student_bert_classifier_forward.1} parent=55 // pred_check
          %p729 = pneg %p413
        $region94: #{student_bert_classifier_forward.1} parent=55 // pred_check_branch
          %731 = sbr.rel (%p729) target = $region96
        $region95: #{student_bert_classifier_forward.1} parent=55 // pred_region
          %p732 = scmp.lt.s32.totalorder %s33, 1
          %s733 = scalar_select %p732, %s33, 1
          %s734 = scalar_lea.vmem %s15, %s733
        $region96: #{student_bert_classifier_forward.1} parent=55 // pred_fallthru
          _
        // Predicated region
        $region97: #{student_bert_classifier_forward.1} parent=55 // pred_check
          %p735 = pneg %p439
        $region98: #{student_bert_classifier_forward.1} parent=55 // pred_check_branch
          %737 = sbr.rel (%p735) target = $region100
        $region99: #{student_bert_classifier_forward.1} parent=55 // pred_region
          %p738 = scmp.lt.s32.totalorder %s33, 1
          %s739 = scalar_select %p738, %s33, 1
          %s740 = scalar_lea.vmem %s16, %s739
        $region100: #{student_bert_classifier_forward.1} parent=55 // pred_fallthru
          _
        // Predicated region
        $region101: #{student_bert_classifier_forward.1} parent=55 // pred_check
          %p741 = pneg %p465
        $region102: #{student_bert_classifier_forward.1} parent=55 // pred_check_branch
          %743 = sbr.rel (%p741) target = $region104
        $region103: #{student_bert_classifier_forward.1} parent=55 // pred_region
          %p744 = scmp.lt.s32.totalorder %s33, 1
          %s745 = scalar_select %p744, %s33, 1
          %s746 = scalar_lea.vmem %s17, %s745
        $region104: #{student_bert_classifier_forward.1} parent=55 // pred_fallthru
          _
      $region56: #{student_bert_classifier_forward.1} parent=5 // pred_fallthru
        _
      %p747 = scmp.le.s32.totalorder 1, %s33
      %p748 = scmp.lt.s32.totalorder %s33, 3
      %p749 = pnand %p747, %p748
      %p750 = pneg %p749
      // Predicated region
      $region105: #{student_bert_classifier_forward.1} parent=5 // pred_check
        _
      $region106: #{student_bert_classifier_forward.1} parent=5 // pred_check_branch
        %752 = sbr.rel (%p749) target = $region108
      $region107: #{student_bert_classifier_forward.1} parent=5 // pred_region
        %s753 = ssub.s32 %s33, 1
        %p754 = pneg %p54
        %p755 = pneg %p51
        %p756 = pneg %p75
        %p757 = pneg %p72
        %p758 = pneg %p96
        %p759 = pneg %p93
        %p760 = pneg %p117
        %p761 = pneg %p114
        %p762 = pneg %p138
        %p763 = pneg %p135
        %p764 = pneg %p159
        %p765 = pneg %p156
        %p766 = scmp.lt.s32.totalorder %s38, 1
        %s767 = scalar_select %p766, %s38, 1
        %s768 = smul.addr %s767, 4
        %s769 = smul.addr %s768, 4
        %s770 = scalar_lea.vmem %s6, %s769
        %p771 = pneg %p185
        %p772 = pneg %p182
        %p773 = scmp.lt.s32.totalorder %s38, 1
        %s774 = scalar_select %p773, %s38, 1
        %s775 = scalar_lea.vmem %s7, %s774
        %p776 = pneg %p211
        %p777 = pneg %p208
        %p778 = scmp.lt.s32.totalorder %s38, 1
        %s779 = scalar_select %p778, %s38, 1
        %s780 = smul.addr %s779, 4
        %s781 = smul.addr %s780, 4
        %s782 = scalar_lea.vmem %s8, %s781
        %p783 = pneg %p237
        %p784 = pneg %p234
        %p785 = scmp.lt.s32.totalorder %s38, 1
        %s786 = scalar_select %p785, %s38, 1
        %s787 = scalar_lea.vmem %s9, %s786
        %p788 = pneg %p263
        %p789 = pneg %p260
        %p790 = scmp.lt.s32.totalorder %s38, 1
        %s791 = scalar_select %p790, %s38, 1
        %s792 = scalar_lea.vmem %s10, %s791
        %p793 = pneg %p289
        %p794 = pneg %p286
        %p795 = scmp.lt.s32.totalorder %s38, 1
        %s796 = scalar_select %p795, %s38, 1
        %s797 = scalar_lea.vmem %s11, %s796
        %p798 = pneg %p315
        %p799 = pneg %p312
        %p800 = scmp.lt.s32.totalorder %s38, 1
        %s801 = scalar_select %p800, %s38, 1
        %s802 = smul.addr %s801, 4
        %s803 = smul.addr %s802, 4
        %s804 = scalar_lea.vmem %s12, %s803
        %p805 = pneg %p341
        %p806 = pneg %p338
        %p807 = scmp.lt.s32.totalorder %s38, 1
        %s808 = scalar_select %p807, %s38, 1
        %s809 = scalar_lea.vmem %s13, %s808
        %p810 = pneg %p367
        %p811 = pneg %p364
        %p812 = scmp.lt.s32.totalorder %s38, 1
        %s813 = scalar_select %p812, %s38, 1
        %s814 = smul.addr %s813, 8
        %s815 = smul.addr %s814, 4
        %s816 = scalar_lea.vmem %s14, %s815
        %p817 = pneg %p393
        %p818 = pneg %p390
        %p819 = scmp.lt.s32.totalorder %s38, 1
        %s820 = scalar_select %p819, %s38, 1
        %s821 = scalar_lea.vmem %s15, %s820
        %p822 = pneg %p419
        %p823 = pneg %p416
        %p824 = scmp.lt.s32.totalorder %s38, 1
        %s825 = scalar_select %p824, %s38, 1
        %s826 = scalar_lea.vmem %s16, %s825
        %p827 = pneg %p445
        %p828 = pneg %p442
        %p829 = scmp.lt.s32.totalorder %s38, 1
        %s830 = scalar_select %p829, %s38, 1
        %s831 = scalar_lea.vmem %s17, %s830
        %p832 = pneg %p471
        %p833 = pneg %p468
        %p834 = pneg %p492
        %p835 = pneg %p489
        %p836 = pneg %p513
        %p837 = pneg %p510
        %p838 = pneg %p534
        %p839 = pneg %p531
        %p840 = pneg %p555
        %p841 = pneg %p552
        %p842 = pneg %p576
        %p843 = pneg %p573
        %p844 = pneg %p597
        %p845 = pneg %p594
        %p846 = pneg %p618
        %p847 = pneg %p615
        %p848 = scmp.lt.s32.totalorder %s38, 1
        %s849 = scalar_select %p848, %s38, 1
        %s850 = smul.addr %s849, 4
        %s851 = smul.addr %s850, 4
        %s852 = scalar_lea.vmem %s6, %s851
        %p853 = scmp.lt.s32.totalorder %s38, 1
        %s854 = scalar_select %p853, %s38, 1
        %s855 = scalar_lea.vmem %s7, %s854
        %p856 = scmp.lt.s32.totalorder %s38, 1
        %s857 = scalar_select %p856, %s38, 1
        %s858 = smul.addr %s857, 4
        %s859 = smul.addr %s858, 4
        %s860 = scalar_lea.vmem %s8, %s859
        %p861 = scmp.lt.s32.totalorder %s38, 1
        %s862 = scalar_select %p861, %s38, 1
        %s863 = scalar_lea.vmem %s9, %s862
        %p864 = scmp.lt.s32.totalorder %s38, 1
        %s865 = scalar_select %p864, %s38, 1
        %s866 = scalar_lea.vmem %s10, %s865
        %p867 = scmp.lt.s32.totalorder %s38, 1
        %s868 = scalar_select %p867, %s38, 1
        %s869 = scalar_lea.vmem %s11, %s868
        %p870 = scmp.lt.s32.totalorder %s38, 1
        %s871 = scalar_select %p870, %s38, 1
        %s872 = smul.addr %s871, 4
        %s873 = smul.addr %s872, 4
        %s874 = scalar_lea.vmem %s12, %s873
        %p875 = scmp.lt.s32.totalorder %s38, 1
        %s876 = scalar_select %p875, %s38, 1
        %s877 = scalar_lea.vmem %s13, %s876
        %p878 = scmp.lt.s32.totalorder %s38, 1
        %s879 = scalar_select %p878, %s38, 1
        %s880 = smul.addr %s879, 8
        %s881 = smul.addr %s880, 4
        %s882 = scalar_lea.vmem %s14, %s881
        %p883 = scmp.lt.s32.totalorder %s38, 1
        %s884 = scalar_select %p883, %s38, 1
        %s885 = scalar_lea.vmem %s15, %s884
        %p886 = scmp.lt.s32.totalorder %s38, 1
        %s887 = scalar_select %p886, %s38, 1
        %s888 = scalar_lea.vmem %s16, %s887
        %p889 = scmp.lt.s32.totalorder %s38, 1
        %s890 = scalar_select %p889, %s38, 1
        %s891 = scalar_lea.vmem %s17, %s890
        %p893 = scmp.eq.s32.totalorder %s38, 0
        // Predicated region
        $region109: #{student_bert_classifier_forward.1} parent=107 // pred_check
          %p894 = pneg %p893
        $region110: #{student_bert_classifier_forward.1} parent=107 // pred_check_branch
          %896 = sbr.rel (%p894) target = $region112
        $region111: #{student_bert_classifier_forward.1} parent=107 // pred_region
          %v897 = vld [vmem:[%s0] sm:$0xff]
          %v898 = vld [vmem:[%s0 + $0x8] sm:$0xff]
          %v899 = vld [vmem:[%s3] sm:$0x1]
          %v900 = vld [vmem:[%s4] sm:$0x1]
          %vm901 = vcmask 261120
          %v902 = vsel %vm901, %v897, 0.0
          %903 = vadd.xlane.f32.xlu0 %v902
          %v904 = vpop.xlane.xlu0 %903
          %v905 = vsel %vm901, %v898, 0.0
          %906 = vadd.xlane.f32.xlu0 %v905
          %v907 = vpop.xlane.xlu0 %906
          %v908 = vrcp.pop 32.0
          %v909 = vmul.f32 %v904, %v908
          %v910 = vmul.f32 %v907, %v908
          %v911 = vsub.f32 %v897, %v909
          %v912 = vsub.f32 %v898, %v910
          %v913 = vmul.f32 %v911, %v911
          %v914 = vmul.f32 %v912, %v912
          %v915 = vsel %vm901, %v913, 0.0
          %916 = vadd.xlane.f32.xlu0 %v915
          %v917 = vpop.xlane.xlu0 %916
          %v918 = vsel %vm901, %v914, 0.0
          %919 = vadd.xlane.f32.xlu0 %v918
          %v920 = vpop.xlane.xlu0 %919
          %v921 = vmul.f32 %v917, %v908
          %v922 = vmul.f32 %v920, %v908
          %v923 = vadd.f32 %v921, 1e-12
          %v924 = vadd.f32 %v922, 1e-12
          %v925 = vrsqrt.pop %v923
          %v926 = vrsqrt.pop %v924
          %v927 = vmul.f32 %v911, %v925
          %v928 = vmul.f32 %v912, %v926
          %v930 = vlaneseq
          %v931 = vshrl.u32 %v930, 7
          %v932 = vsub.s32 0, %v931
          %v933 = vrot.slane %v899, %v932
          %v935 = vmul.f32 %v927, %v933
          %v936 = vmul.f32 %v928, %v933
          %v938 = vlaneseq
          %v939 = vshrl.u32 %v938, 7
          %v940 = vsub.s32 0, %v939
          %v941 = vrot.slane %v900, %v940
          %v943 = vadd.f32 %v935, %v941
          %v944 = vadd.f32 %v936, %v941
          %945 = vst.msk [vmem:[#allocation3] sm:$0xff] %vm901, %v943
          %946 = vst.msk [vmem:[#allocation3 + $0x8] sm:$0xff] %vm901, %v944
          %v947 = vld [vmem:[%s1] sm:$0xff]
          %v948 = vld [vmem:[%s1 + $0x8] sm:$0xff]
          %v949 = vld [vmem:[%s2] sm:$0x1]
          %951 = vset.pattern.permute.xlu0 0
          %952 = vperm.xlu0 %951, %v947
          %v953 = vpop.permute.xlu0 %952
          %956 = vset.pattern.permute.xlu0 0
          %957 = vperm.xlu0 %956, %v948
          %v958 = vpop.permute.xlu0 %957
          %v961 = vlaneseq
          %v962 = vshrl.u32 %v961, 7
          %v963 = vsub.s32 0, %v962
          %v964 = vrot.slane %v949, %v963
          %vm966 = vcmp.eq.f32.partialorder %v953, %v964
          %vm967 = vcmp.eq.f32.partialorder %v958, %v964
          %v968 = vsel %vm966, 0.0, -10000.0
          %v969 = vsel %vm967, 0.0, -10000.0
          %vm970 = vcmask 130048
          %971 = vst.msk [vmem:[#allocation2] sm:$0xff] %vm970, %v968
          %972 = vst.msk [vmem:[#allocation2 + $0x8] sm:$0xff] %vm970, %v969
          %vm973 = vcmask 254976
          %974 = vst.msk [vmem:[#allocation5] sm:$0x3] %vm973, 0.0
          %975 = vst [vmem:[#allocation7] sm:$0x3] 0.0
        $region112: #{student_bert_classifier_forward.1} parent=107 // pred_fallthru
          _
        %v976 = vld [vmem:[#allocation3] sm:$0xff]
        %v977 = vld [vmem:[#allocation3 + $0x8] sm:$0xff]
        %v978 = vpack.c.bf16 %v977, %v976
        %v979 = vld [vmem:[%s852] sm:$0xf]
        %v980 = vld [vmem:[%s852 + $0x4] sm:$0xf]
        %v981 = vld [vmem:[%s852 + $0x8] sm:$0xf]
        %v982 = vld [vmem:[%s852 + $0xc] sm:$0xf]
        %v983 = vld [vmem:[%s855] sm:$0x1]
        %v985 = vlaneseq
        %v986 = vshrl.u32 %v985, 7
        %v987 = vsub.s32 0, %v986
        %v988 = vrot.slane %v983, %v987
        %v994 = vunpack.c.l.b16 %v979
        %v995 = vunpack.c.l.b16 %v980
        %v996 = vunpack.c.l.b16 %v981
        %v997 = vunpack.c.l.b16 %v982
        %v998 = vpack.c.b16 %v995, %v994
        %v999 = vpack.c.b16 %v997, %v996
        %vm1002 = vcmask 261120
        %v1004 = vsel %vm1002, %v978, 0
        %1006 = vmatprep.subr.bf16.mxu0 0
        %1007 = vmatpush1.bf16.msra.mxu0 %v998
        %1008 = vmatprep.subr.bf16.mxu0 0
        %1009 = vmatpush1.bf16.msra.mxu0 %v999
        %1010 = vmatprep.subr.bf16.mxu0 0
        %1011 = vmatpush1.bf16.msra.mxu0 0
        %1012 = vmatprep.subr.bf16.mxu0 0
        %1013 = vmatpush1.bf16.msra.mxu0 0
        %1014 = vmatprep.subr.bf16.mxu0 0
        %1015 = vmatpush1.bf16.msra.mxu0 0
        %1016 = vmatprep.subr.bf16.mxu0 0
        %1017 = vmatpush1.bf16.msra.mxu0 0
        %1018 = vmatprep.subr.bf16.mxu0 0
        %1019 = vmatpush1.bf16.msra.mxu0 0
        %1020 = vmatprep.subr.bf16.mxu0 0
        %1021 = vmatpush1.bf16.msra.mxu0 0
        %1022 = vmatprep.subr.bf16.mxu0 0
        %1023 = vmatpush1.bf16.msra.mxu0 0
        %1024 = vmatprep.subr.bf16.mxu0 0
        %1025 = vmatpush1.bf16.msra.mxu0 0
        %1026 = vmatprep.subr.bf16.mxu0 0
        %1027 = vmatpush1.bf16.msra.mxu0 0
        %1028 = vmatprep.subr.bf16.mxu0 0
        %1029 = vmatpush1.bf16.msra.mxu0 0
        %1030 = vmatprep.subr.bf16.mxu0 0
        %1031 = vmatpush1.bf16.msra.mxu0 0
        %1032 = vmatprep.subr.bf16.mxu0 0
        %1033 = vmatpush1.bf16.msra.mxu0 0
        %1034 = vmatprep.subr.bf16.mxu0 0
        %1035 = vmatpush1.bf16.msra.mxu0 0
        %1036 = vmatprep.subr.bf16.mxu0 0
        %1037 = vmatpush1.bf16.msra.mxu0 0
        %1038 = vmatprep.mubr.bf16.mxu0 0
        %1039 = vmatmul.mubr.bf16.gmra.mrb[0].mxu0 %v1004
        %v1040 = vpop.f32.mrb[0].mxu0
        %v1041 = vadd.f32 %v988, %v1040
        %v1042 = vpop.f32.mrb[0].mxu0
        %v1043 = vpop.f32.mrb[0].mxu0
        %v1044 = vadd.f32 %v988, %v1043
        %v1045 = vpop.f32.mrb[0].mxu0
        %1046 = vdwg.mxu0
        %v1047 = vpack.c.bf16 %v1044, %v1041
        %v1048 = vld [vmem:[#allocation2] sm:$0xff]
        %v1049 = vld [vmem:[#allocation2 + $0x8] sm:$0xff]
        %v1050 = vld [vmem:[%s5] sm:$0x3]
        %v1052 = vpack.i.b16 %v1050, %v1050
        %v1054 = vlaneseq
        %v1055 = vshrl.u32 %v1054, 7
        %v1056 = vsub.s32 0, %v1055
        %v1057 = vrot.slane %v1052, %v1056
        %v1058 = vmul.bf16 %v1047, %v1057
        %1060 = vrot.lane.b32.xlu0 %v1047, 96
        %v1061 = vpop.permute.xlu0 %1060
        %v1063 = vsel %vm1002, %v1058, 0
        %v1066 = vsel %vm1002, %v1061, 0
        %1068 = vmatprep.subr.bf16.mxu0 0
        %1069 = vmatpush1.bf16.xpose.msra.mxu0 %v1066
        %1070 = vmatprep.subr.bf16.mxu0 0
        %1071 = vmatpush1.bf16.xpose.msra.mxu0 0
        %1072 = vmatprep.subr.bf16.mxu0 0
        %1073 = vmatpush1.bf16.xpose.msra.mxu0 0
        %1074 = vmatprep.subr.bf16.mxu0 0
        %1075 = vmatpush1.bf16.xpose.msra.mxu0 0
        %1076 = vmatprep.subr.bf16.mxu0 0
        %1077 = vmatpush1.bf16.xpose.msra.mxu0 0
        %1078 = vmatprep.subr.bf16.mxu0 0
        %1079 = vmatpush1.bf16.xpose.msra.mxu0 0
        %1080 = vmatprep.subr.bf16.mxu0 0
        %1081 = vmatpush1.bf16.xpose.msra.mxu0 0
        %1082 = vmatprep.subr.bf16.mxu0 0
        %1083 = vmatpush1.bf16.xpose.msra.mxu0 0
        %1084 = vmatprep.subr.bf16.mxu0 0
        %1085 = vmatpush1.bf16.xpose.msra.mxu0 0
        %1086 = vmatprep.subr.bf16.mxu0 0
        %1087 = vmatpush1.bf16.xpose.msra.mxu0 0
        %1088 = vmatprep.subr.bf16.mxu0 0
        %1089 = vmatpush1.bf16.xpose.msra.mxu0 0
        %1090 = vmatprep.subr.bf16.mxu0 0
        %1091 = vmatpush1.bf16.xpose.msra.mxu0 0
        %1092 = vmatprep.subr.bf16.mxu0 0
        %1093 = vmatpush1.bf16.xpose.msra.mxu0 0
        %1094 = vmatprep.subr.bf16.mxu0 0
        %1095 = vmatpush1.bf16.xpose.msra.mxu0 0
        %1096 = vmatprep.subr.bf16.mxu0 0
        %1097 = vmatpush1.bf16.xpose.msra.mxu0 0
        %1098 = vmatprep.subr.bf16.mxu0 0
        %1099 = vmatpush1.bf16.xpose.msra.mxu0 0
        %1100 = vmatprep.mubr.bf16.mxu0 0
        %1101 = vmatmul.mubr.bf16.gmra.mrb[0].mxu0 %v1063
        %v1102 = vpop.f32.mrb[0].mxu0
        %v1103 = vadd.f32 %v1048, %v1102
        %v1104 = vpop.f32.mrb[0].mxu0
        %v1105 = vpop.f32.mrb[0].mxu0
        %v1106 = vadd.f32 %v1049, %v1105
        %v1107 = vpop.f32.mrb[0].mxu0
        %1108 = vdwg.mxu0
        %vm1109 = vcmask 130048
        %v1110 = vsel %vm1109, %v1103, -inf
        %1111 = vmax.xlane.f32.xlu0 %v1110
        %v1112 = vpop.xlane.xlu0 %1111
        %v1113 = vsel %vm1109, %v1106, -inf
        %1114 = vmax.xlane.f32.xlu0 %v1113
        %v1115 = vpop.xlane.xlu0 %1114
        %v1116 = vsub.f32 %v1103, %v1112
        %v1117 = vsub.f32 %v1106, %v1115
        %v1118 = vmul.f32 %v1116, 1.442695
        %v1119 = vpow.pop %v1118
        %v1120 = vmul.f32 %v1117, 1.442695
        %v1121 = vpow.pop %v1120
        %v1122 = vsel %vm1109, %v1119, 0.0
        %1123 = vadd.xlane.f32.xlu0 %v1122
        %v1124 = vpop.xlane.xlu0 %1123
        %v1125 = vsel %vm1109, %v1121, 0.0
        %1126 = vadd.xlane.f32.xlu0 %v1125
        %v1127 = vpop.xlane.xlu0 %1126
        %v1128 = vrcp.pop %v1124
        %v1129 = vrcp.pop %v1127
        %v1130 = vmul.f32 %v1119, %v1128
        %v1131 = vmul.f32 %v1121, %v1129
        %v1132 = vpack.c.bf16 %v1131, %v1130
        %1134 = vrot.lane.b32.xlu0 %v1057, 64
        %v1135 = vpop.permute.xlu0 %1134
        %v1137 = vmul.bf16 %v1047, %v1135
        %v1138 = vshrl.u32 %v1050, 16
        %v1139 = vpack.i.b16 %v1138, %v1138
        %v1141 = vlaneseq
        %v1142 = vshrl.u32 %v1141, 7
        %v1143 = vsub.s32 0, %v1142
        %v1144 = vrot.slane %v1139, %v1143
        %v1145 = vmul.bf16 %v1047, %v1144
        %v1147 = vsel %vm1002, %v1145, 0
        %1149 = vmatprep.subr.bf16.mxu0 0
        %1150 = vmatpush1.bf16.xpose.msra.mxu0 %v1066
        %1151 = vmatprep.subr.bf16.mxu0 0
        %1152 = vmatpush1.bf16.xpose.msra.mxu0 0
        %1153 = vmatprep.subr.bf16.mxu0 0
        %1154 = vmatpush1.bf16.xpose.msra.mxu0 0
        %1155 = vmatprep.subr.bf16.mxu0 0
        %1156 = vmatpush1.bf16.xpose.msra.mxu0 0
        %1157 = vmatprep.subr.bf16.mxu0 0
        %1158 = vmatpush1.bf16.xpose.msra.mxu0 0
        %1159 = vmatprep.subr.bf16.mxu0 0
        %1160 = vmatpush1.bf16.xpose.msra.mxu0 0
        %1161 = vmatprep.subr.bf16.mxu0 0
        %1162 = vmatpush1.bf16.xpose.msra.mxu0 0
        %1163 = vmatprep.subr.bf16.mxu0 0
        %1164 = vmatpush1.bf16.xpose.msra.mxu0 0
        %1165 = vmatprep.subr.bf16.mxu0 0
        %1166 = vmatpush1.bf16.xpose.msra.mxu0 0
        %1167 = vmatprep.subr.bf16.mxu0 0
        %1168 = vmatpush1.bf16.xpose.msra.mxu0 0
        %1169 = vmatprep.subr.bf16.mxu0 0
        %1170 = vmatpush1.bf16.xpose.msra.mxu0 0
        %1171 = vmatprep.subr.bf16.mxu0 0
        %1172 = vmatpush1.bf16.xpose.msra.mxu0 0
        %1173 = vmatprep.subr.bf16.mxu0 0
        %1174 = vmatpush1.bf16.xpose.msra.mxu0 0
        %1175 = vmatprep.subr.bf16.mxu0 0
        %1176 = vmatpush1.bf16.xpose.msra.mxu0 0
        %1177 = vmatprep.subr.bf16.mxu0 0
        %1178 = vmatpush1.bf16.xpose.msra.mxu0 0
        %1179 = vmatprep.subr.bf16.mxu0 0
        %1180 = vmatpush1.bf16.xpose.msra.mxu0 0
        %1181 = vmatprep.mubr.bf16.mxu0 0
        %1182 = vmatmul.mubr.bf16.gmra.mrb[0].mxu0 %v1147
        %v1183 = vpop.f32.mrb[0].mxu0
        %v1184 = vadd.f32 %v1048, %v1183
        %v1185 = vpop.f32.mrb[0].mxu0
        %v1186 = vpop.f32.mrb[0].mxu0
        %v1187 = vadd.f32 %v1049, %v1186
        %v1188 = vpop.f32.mrb[0].mxu0
        %1189 = vdwg.mxu0
        %v1190 = vsel %vm1109, %v1184, -inf
        %1191 = vmax.xlane.f32.xlu0 %v1190
        %v1192 = vpop.xlane.xlu0 %1191
        %v1193 = vsel %vm1109, %v1187, -inf
        %1194 = vmax.xlane.f32.xlu0 %v1193
        %v1195 = vpop.xlane.xlu0 %1194
        %v1196 = vsub.f32 %v1184, %v1192
        %v1197 = vsub.f32 %v1187, %v1195
        %v1198 = vmul.f32 %v1196, 1.442695
        %v1199 = vpow.pop %v1198
        %v1200 = vmul.f32 %v1197, 1.442695
        %v1201 = vpow.pop %v1200
        %v1202 = vsel %vm1109, %v1199, 0.0
        %1203 = vadd.xlane.f32.xlu0 %v1202
        %v1204 = vpop.xlane.xlu0 %1203
        %v1205 = vsel %vm1109, %v1201, 0.0
        %1206 = vadd.xlane.f32.xlu0 %v1205
        %v1207 = vpop.xlane.xlu0 %1206
        %v1208 = vrcp.pop %v1204
        %v1209 = vrcp.pop %v1207
        %v1210 = vmul.f32 %v1199, %v1208
        %v1211 = vmul.f32 %v1201, %v1209
        %v1212 = vpack.c.bf16 %v1211, %v1210
        %1214 = vrot.lane.b32.xlu0 %v1144, 64
        %v1215 = vpop.permute.xlu0 %1214
        %v1217 = vmul.bf16 %v1047, %v1215
        %1219 = vrot.lane.b32.xlu0 %v1217, 64
        %v1220 = vpop.permute.xlu0 %1219
        %v1223 = vsel %vm1109, %v1212, 0
        %1225 = vmatprep.subr.bf16.mxu0 0
        %1226 = vmatpush1.bf16.msra.mxu0 %v1220
        %1227 = vmatprep.subr.bf16.mxu0 0
        %1228 = vmatpush1.bf16.msra.mxu0 0
        %1229 = vmatprep.subr.bf16.mxu0 0
        %1230 = vmatpush1.bf16.msra.mxu0 0
        %1231 = vmatprep.subr.bf16.mxu0 0
        %1232 = vmatpush1.bf16.msra.mxu0 0
        %1233 = vmatprep.subr.bf16.mxu0 0
        %1234 = vmatpush1.bf16.msra.mxu0 0
        %1235 = vmatprep.subr.bf16.mxu0 0
        %1236 = vmatpush1.bf16.msra.mxu0 0
        %1237 = vmatprep.subr.bf16.mxu0 0
        %1238 = vmatpush1.bf16.msra.mxu0 0
        %1239 = vmatprep.subr.bf16.mxu0 0
        %1240 = vmatpush1.bf16.msra.mxu0 0
        %1241 = vmatprep.subr.bf16.mxu0 0
        %1242 = vmatpush1.bf16.msra.mxu0 0
        %1243 = vmatprep.subr.bf16.mxu0 0
        %1244 = vmatpush1.bf16.msra.mxu0 0
        %1245 = vmatprep.subr.bf16.mxu0 0
        %1246 = vmatpush1.bf16.msra.mxu0 0
        %1247 = vmatprep.subr.bf16.mxu0 0
        %1248 = vmatpush1.bf16.msra.mxu0 0
        %1249 = vmatprep.subr.bf16.mxu0 0
        %1250 = vmatpush1.bf16.msra.mxu0 0
        %1251 = vmatprep.subr.bf16.mxu0 0
        %1252 = vmatpush1.bf16.msra.mxu0 0
        %1253 = vmatprep.subr.bf16.mxu0 0
        %1254 = vmatpush1.bf16.msra.mxu0 0
        %1255 = vmatprep.subr.bf16.mxu0 0
        %1256 = vmatpush1.bf16.msra.mxu0 0
        %1257 = vmatprep.mubr.bf16.mxu0 0
        %1258 = vmatmul.mubr.bf16.gmra.mrb[0].mxu0 %v1223
        %v1259 = vpop.f32.mrb[0].mxu0
        %v1260 = vadd.f32 0.0, %v1259
        %v1261 = vpop.f32.mrb[0].mxu0
        %v1262 = vpop.f32.mrb[0].mxu0
        %v1263 = vadd.f32 0.0, %v1262
        %v1264 = vpop.f32.mrb[0].mxu0
        %1265 = vdwg.mxu0
        %1267 = vrot.lane.b32.xlu0 %v1137, 64
        %v1268 = vpop.permute.xlu0 %1267
        %v1271 = vsel %vm1109, %v1132, 0
        %1273 = vmatprep.subr.bf16.mxu0 0
        %1274 = vmatpush1.bf16.msra.mxu0 %v1268
        %1275 = vmatprep.subr.bf16.mxu0 0
        %1276 = vmatpush1.bf16.msra.mxu0 0
        %1277 = vmatprep.subr.bf16.mxu0 0
        %1278 = vmatpush1.bf16.msra.mxu0 0
        %1279 = vmatprep.subr.bf16.mxu0 0
        %1280 = vmatpush1.bf16.msra.mxu0 0
        %1281 = vmatprep.subr.bf16.mxu0 0
        %1282 = vmatpush1.bf16.msra.mxu0 0
        %1283 = vmatprep.subr.bf16.mxu0 0
        %1284 = vmatpush1.bf16.msra.mxu0 0
        %1285 = vmatprep.subr.bf16.mxu0 0
        %1286 = vmatpush1.bf16.msra.mxu0 0
        %1287 = vmatprep.subr.bf16.mxu0 0
        %1288 = vmatpush1.bf16.msra.mxu0 0
        %1289 = vmatprep.subr.bf16.mxu0 0
        %1290 = vmatpush1.bf16.msra.mxu0 0
        %1291 = vmatprep.subr.bf16.mxu0 0
        %1292 = vmatpush1.bf16.msra.mxu0 0
        %1293 = vmatprep.subr.bf16.mxu0 0
        %1294 = vmatpush1.bf16.msra.mxu0 0
        %1295 = vmatprep.subr.bf16.mxu0 0
        %1296 = vmatpush1.bf16.msra.mxu0 0
        %1297 = vmatprep.subr.bf16.mxu0 0
        %1298 = vmatpush1.bf16.msra.mxu0 0
        %1299 = vmatprep.subr.bf16.mxu0 0
        %1300 = vmatpush1.bf16.msra.mxu0 0
        %1301 = vmatprep.subr.bf16.mxu0 0
        %1302 = vmatpush1.bf16.msra.mxu0 0
        %1303 = vmatprep.subr.bf16.mxu0 0
        %1304 = vmatpush1.bf16.msra.mxu0 0
        %1305 = vmatprep.mubr.bf16.mxu0 0
        %1306 = vmatmul.mubr.bf16.gmra.mrb[0].mxu0 %v1271
        %v1307 = vpop.f32.mrb[0].mxu0
        %v1308 = vadd.f32 %v1260, %v1307
        %v1309 = vpop.f32.mrb[0].mxu0
        %v1310 = vpop.f32.mrb[0].mxu0
        %v1311 = vadd.f32 %v1263, %v1310
        %v1312 = vpop.f32.mrb[0].mxu0
        %1313 = vdwg.mxu0
        %v1314 = vlaneseq
        %v1315 = vshrl.u32 %v1314, 7
        %v1316 = vsub.s32 1, %v1315
        %v1317 = vrot.slane %v1052, %v1316
        %v1318 = vmul.bf16 %v1047, %v1317
        %v1320 = vsel %vm1002, %v1318, 0
        %1322 = vmatprep.subr.bf16.mxu0 0
        %1323 = vmatpush1.bf16.xpose.msra.mxu0 %v1066
        %1324 = vmatprep.subr.bf16.mxu0 0
        %1325 = vmatpush1.bf16.xpose.msra.mxu0 0
        %1326 = vmatprep.subr.bf16.mxu0 0
        %1327 = vmatpush1.bf16.xpose.msra.mxu0 0
        %1328 = vmatprep.subr.bf16.mxu0 0
        %1329 = vmatpush1.bf16.xpose.msra.mxu0 0
        %1330 = vmatprep.subr.bf16.mxu0 0
        %1331 = vmatpush1.bf16.xpose.msra.mxu0 0
        %1332 = vmatprep.subr.bf16.mxu0 0
        %1333 = vmatpush1.bf16.xpose.msra.mxu0 0
        %1334 = vmatprep.subr.bf16.mxu0 0
        %1335 = vmatpush1.bf16.xpose.msra.mxu0 0
        %1336 = vmatprep.subr.bf16.mxu0 0
        %1337 = vmatpush1.bf16.xpose.msra.mxu0 0
        %1338 = vmatprep.subr.bf16.mxu0 0
        %1339 = vmatpush1.bf16.xpose.msra.mxu0 0
        %1340 = vmatprep.subr.bf16.mxu0 0
        %1341 = vmatpush1.bf16.xpose.msra.mxu0 0
        %1342 = vmatprep.subr.bf16.mxu0 0
        %1343 = vmatpush1.bf16.xpose.msra.mxu0 0
        %1344 = vmatprep.subr.bf16.mxu0 0
        %1345 = vmatpush1.bf16.xpose.msra.mxu0 0
        %1346 = vmatprep.subr.bf16.mxu0 0
        %1347 = vmatpush1.bf16.xpose.msra.mxu0 0
        %1348 = vmatprep.subr.bf16.mxu0 0
        %1349 = vmatpush1.bf16.xpose.msra.mxu0 0
        %1350 = vmatprep.subr.bf16.mxu0 0
        %1351 = vmatpush1.bf16.xpose.msra.mxu0 0
        %1352 = vmatprep.subr.bf16.mxu0 0
        %1353 = vmatpush1.bf16.xpose.msra.mxu0 0
        %1354 = vmatprep.mubr.bf16.mxu0 0
        %1355 = vmatmul.mubr.bf16.gmra.mrb[0].mxu0 %v1320
        %v1356 = vpop.f32.mrb[0].mxu0
        %v1357 = vadd.f32 %v1048, %v1356
        %v1358 = vpop.f32.mrb[0].mxu0
        %v1359 = vpop.f32.mrb[0].mxu0
        %v1360 = vadd.f32 %v1049, %v1359
        %v1361 = vpop.f32.mrb[0].mxu0
        %1362 = vdwg.mxu0
        %v1363 = vsel %vm1109, %v1357, -inf
        %1364 = vmax.xlane.f32.xlu0 %v1363
        %v1365 = vpop.xlane.xlu0 %1364
        %v1366 = vsel %vm1109, %v1360, -inf
        %1367 = vmax.xlane.f32.xlu0 %v1366
        %v1368 = vpop.xlane.xlu0 %1367
        %v1369 = vsub.f32 %v1357, %v1365
        %v1370 = vsub.f32 %v1360, %v1368
        %v1371 = vmul.f32 %v1369, 1.442695
        %v1372 = vpow.pop %v1371
        %v1373 = vmul.f32 %v1370, 1.442695
        %v1374 = vpow.pop %v1373
        %v1375 = vsel %vm1109, %v1372, 0.0
        %1376 = vadd.xlane.f32.xlu0 %v1375
        %v1377 = vpop.xlane.xlu0 %1376
        %v1378 = vsel %vm1109, %v1374, 0.0
        %1379 = vadd.xlane.f32.xlu0 %v1378
        %v1380 = vpop.xlane.xlu0 %1379
        %v1381 = vrcp.pop %v1377
        %v1382 = vrcp.pop %v1380
        %v1383 = vmul.f32 %v1372, %v1381
        %v1384 = vmul.f32 %v1374, %v1382
        %v1385 = vpack.c.bf16 %v1384, %v1383
        %1387 = vrot.lane.b32.xlu0 %v1317, 64
        %v1388 = vpop.permute.xlu0 %1387
        %v1390 = vmul.bf16 %v1047, %v1388
        %1392 = vrot.lane.b32.xlu0 %v1390, 64
        %v1393 = vpop.permute.xlu0 %1392
        %v1396 = vsel %vm1109, %v1385, 0
        %1398 = vmatprep.subr.bf16.mxu0 0
        %1399 = vmatpush1.bf16.msra.mxu0 %v1393
        %1400 = vmatprep.subr.bf16.mxu0 0
        %1401 = vmatpush1.bf16.msra.mxu0 0
        %1402 = vmatprep.subr.bf16.mxu0 0
        %1403 = vmatpush1.bf16.msra.mxu0 0
        %1404 = vmatprep.subr.bf16.mxu0 0
        %1405 = vmatpush1.bf16.msra.mxu0 0
        %1406 = vmatprep.subr.bf16.mxu0 0
        %1407 = vmatpush1.bf16.msra.mxu0 0
        %1408 = vmatprep.subr.bf16.mxu0 0
        %1409 = vmatpush1.bf16.msra.mxu0 0
        %1410 = vmatprep.subr.bf16.mxu0 0
        %1411 = vmatpush1.bf16.msra.mxu0 0
        %1412 = vmatprep.subr.bf16.mxu0 0
        %1413 = vmatpush1.bf16.msra.mxu0 0
        %1414 = vmatprep.subr.bf16.mxu0 0
        %1415 = vmatpush1.bf16.msra.mxu0 0
        %1416 = vmatprep.subr.bf16.mxu0 0
        %1417 = vmatpush1.bf16.msra.mxu0 0
        %1418 = vmatprep.subr.bf16.mxu0 0
        %1419 = vmatpush1.bf16.msra.mxu0 0
        %1420 = vmatprep.subr.bf16.mxu0 0
        %1421 = vmatpush1.bf16.msra.mxu0 0
        %1422 = vmatprep.subr.bf16.mxu0 0
        %1423 = vmatpush1.bf16.msra.mxu0 0
        %1424 = vmatprep.subr.bf16.mxu0 0
        %1425 = vmatpush1.bf16.msra.mxu0 0
        %1426 = vmatprep.subr.bf16.mxu0 0
        %1427 = vmatpush1.bf16.msra.mxu0 0
        %1428 = vmatprep.subr.bf16.mxu0 0
        %1429 = vmatpush1.bf16.msra.mxu0 0
        %1430 = vmatprep.mubr.bf16.mxu0 0
        %1431 = vmatmul.mubr.bf16.gmra.mrb[0].mxu0 %v1396
        %v1432 = vpop.f32.mrb[0].mxu0
        %v1433 = vadd.f32 0.0, %v1432
        %v1434 = vpop.f32.mrb[0].mxu0
        %v1435 = vpop.f32.mrb[0].mxu0
        %v1436 = vadd.f32 0.0, %v1435
        %v1437 = vpop.f32.mrb[0].mxu0
        %1438 = vdwg.mxu0
        %v1439 = vadd.f32 %v1308, %v1433
        %v1440 = vadd.f32 %v1311, %v1436
        %v1441 = vlaneseq
        %v1442 = vshrl.u32 %v1441, 7
        %v1443 = vsub.s32 1, %v1442
        %v1444 = vrot.slane %v1139, %v1443
        %v1445 = vmul.bf16 %v1047, %v1444
        %v1447 = vsel %vm1002, %v1445, 0
        %1449 = vmatprep.subr.bf16.mxu0 0
        %1450 = vmatpush1.bf16.xpose.msra.mxu0 %v1066
        %1451 = vmatprep.subr.bf16.mxu0 0
        %1452 = vmatpush1.bf16.xpose.msra.mxu0 0
        %1453 = vmatprep.subr.bf16.mxu0 0
        %1454 = vmatpush1.bf16.xpose.msra.mxu0 0
        %1455 = vmatprep.subr.bf16.mxu0 0
        %1456 = vmatpush1.bf16.xpose.msra.mxu0 0
        %1457 = vmatprep.subr.bf16.mxu0 0
        %1458 = vmatpush1.bf16.xpose.msra.mxu0 0
        %1459 = vmatprep.subr.bf16.mxu0 0
        %1460 = vmatpush1.bf16.xpose.msra.mxu0 0
        %1461 = vmatprep.subr.bf16.mxu0 0
        %1462 = vmatpush1.bf16.xpose.msra.mxu0 0
        %1463 = vmatprep.subr.bf16.mxu0 0
        %1464 = vmatpush1.bf16.xpose.msra.mxu0 0
        %1465 = vmatprep.subr.bf16.mxu0 0
        %1466 = vmatpush1.bf16.xpose.msra.mxu0 0
        %1467 = vmatprep.subr.bf16.mxu0 0
        %1468 = vmatpush1.bf16.xpose.msra.mxu0 0
        %1469 = vmatprep.subr.bf16.mxu0 0
        %1470 = vmatpush1.bf16.xpose.msra.mxu0 0
        %1471 = vmatprep.subr.bf16.mxu0 0
        %1472 = vmatpush1.bf16.xpose.msra.mxu0 0
        %1473 = vmatprep.subr.bf16.mxu0 0
        %1474 = vmatpush1.bf16.xpose.msra.mxu0 0
        %1475 = vmatprep.subr.bf16.mxu0 0
        %1476 = vmatpush1.bf16.xpose.msra.mxu0 0
        %1477 = vmatprep.subr.bf16.mxu0 0
        %1478 = vmatpush1.bf16.xpose.msra.mxu0 0
        %1479 = vmatprep.subr.bf16.mxu0 0
        %1480 = vmatpush1.bf16.xpose.msra.mxu0 0
        %1481 = vmatprep.mubr.bf16.mxu0 0
        %1482 = vmatmul.mubr.bf16.gmra.mrb[0].mxu0 %v1447
        %v1483 = vpop.f32.mrb[0].mxu0
        %v1484 = vadd.f32 %v1048, %v1483
        %v1485 = vpop.f32.mrb[0].mxu0
        %v1486 = vpop.f32.mrb[0].mxu0
        %v1487 = vadd.f32 %v1049, %v1486
        %v1488 = vpop.f32.mrb[0].mxu0
        %1489 = vdwg.mxu0
        %v1490 = vsel %vm1109, %v1484, -inf
        %1491 = vmax.xlane.f32.xlu0 %v1490
        %v1492 = vpop.xlane.xlu0 %1491
        %v1493 = vsel %vm1109, %v1487, -inf
        %1494 = vmax.xlane.f32.xlu0 %v1493
        %v1495 = vpop.xlane.xlu0 %1494
        %v1496 = vsub.f32 %v1484, %v1492
        %v1497 = vsub.f32 %v1487, %v1495
        %v1498 = vmul.f32 %v1496, 1.442695
        %v1499 = vpow.pop %v1498
        %v1500 = vmul.f32 %v1497, 1.442695
        %v1501 = vpow.pop %v1500
        %v1502 = vsel %vm1109, %v1499, 0.0
        %1503 = vadd.xlane.f32.xlu0 %v1502
        %v1504 = vpop.xlane.xlu0 %1503
        %v1505 = vsel %vm1109, %v1501, 0.0
        %1506 = vadd.xlane.f32.xlu0 %v1505
        %v1507 = vpop.xlane.xlu0 %1506
        %v1508 = vrcp.pop %v1504
        %v1509 = vrcp.pop %v1507
        %v1510 = vmul.f32 %v1499, %v1508
        %v1511 = vmul.f32 %v1501, %v1509
        %v1512 = vpack.c.bf16 %v1511, %v1510
        %1514 = vrot.lane.b32.xlu0 %v1444, 64
        %v1515 = vpop.permute.xlu0 %1514
        %v1517 = vmul.bf16 %v1047, %v1515
        %1519 = vrot.lane.b32.xlu0 %v1517, 64
        %v1520 = vpop.permute.xlu0 %1519
        %v1523 = vsel %vm1109, %v1512, 0
        %1525 = vmatprep.subr.bf16.mxu0 0
        %1526 = vmatpush1.bf16.msra.mxu0 %v1520
        %1527 = vmatprep.subr.bf16.mxu0 0
        %1528 = vmatpush1.bf16.msra.mxu0 0
        %1529 = vmatprep.subr.bf16.mxu0 0
        %1530 = vmatpush1.bf16.msra.mxu0 0
        %1531 = vmatprep.subr.bf16.mxu0 0
        %1532 = vmatpush1.bf16.msra.mxu0 0
        %1533 = vmatprep.subr.bf16.mxu0 0
        %1534 = vmatpush1.bf16.msra.mxu0 0
        %1535 = vmatprep.subr.bf16.mxu0 0
        %1536 = vmatpush1.bf16.msra.mxu0 0
        %1537 = vmatprep.subr.bf16.mxu0 0
        %1538 = vmatpush1.bf16.msra.mxu0 0
        %1539 = vmatprep.subr.bf16.mxu0 0
        %1540 = vmatpush1.bf16.msra.mxu0 0
        %1541 = vmatprep.subr.bf16.mxu0 0
        %1542 = vmatpush1.bf16.msra.mxu0 0
        %1543 = vmatprep.subr.bf16.mxu0 0
        %1544 = vmatpush1.bf16.msra.mxu0 0
        %1545 = vmatprep.subr.bf16.mxu0 0
        %1546 = vmatpush1.bf16.msra.mxu0 0
        %1547 = vmatprep.subr.bf16.mxu0 0
        %1548 = vmatpush1.bf16.msra.mxu0 0
        %1549 = vmatprep.subr.bf16.mxu0 0
        %1550 = vmatpush1.bf16.msra.mxu0 0
        %1551 = vmatprep.subr.bf16.mxu0 0
        %1552 = vmatpush1.bf16.msra.mxu0 0
        %1553 = vmatprep.subr.bf16.mxu0 0
        %1554 = vmatpush1.bf16.msra.mxu0 0
        %1555 = vmatprep.subr.bf16.mxu0 0
        %1556 = vmatpush1.bf16.msra.mxu0 0
        %1557 = vmatprep.mubr.bf16.mxu0 0
        %1558 = vmatmul.mubr.bf16.gmra.mrb[0].mxu0 %v1523
        %v1559 = vpop.f32.mrb[0].mxu0
        %v1560 = vadd.f32 0.0, %v1559
        %v1561 = vpop.f32.mrb[0].mxu0
        %v1562 = vpop.f32.mrb[0].mxu0
        %v1563 = vadd.f32 0.0, %v1562
        %v1564 = vpop.f32.mrb[0].mxu0
        %1565 = vdwg.mxu0
        %v1566 = vadd.f32 %v1439, %v1560
        %v1567 = vadd.f32 %v1440, %v1563
        %v1568 = vpack.c.bf16 %v1567, %v1566
        %v1569 = vld [vmem:[%s860] sm:$0xf]
        %v1570 = vld [vmem:[%s860 + $0x4] sm:$0xf]
        %v1571 = vld [vmem:[%s860 + $0x8] sm:$0xf]
        %v1572 = vld [vmem:[%s860 + $0xc] sm:$0xf]
        %v1573 = vld [vmem:[%s863] sm:$0x1]
        %v1575 = vlaneseq
        %v1576 = vshrl.u32 %v1575, 7
        %v1577 = vsub.s32 0, %v1576
        %v1578 = vrot.slane %v1573, %v1577
        %v1584 = vunpack.c.l.b16 %v1569
        %v1585 = vunpack.c.l.b16 %v1570
        %v1586 = vunpack.c.l.b16 %v1571
        %v1587 = vunpack.c.l.b16 %v1572
        %v1588 = vpack.c.b16 %v1585, %v1584
        %v1589 = vpack.c.b16 %v1587, %v1586
        %v1593 = vsel %vm1002, %v1568, 0
        %1595 = vmatprep.subr.bf16.mxu0 0
        %1596 = vmatpush1.bf16.msra.mxu0 %v1588
        %1597 = vmatprep.subr.bf16.mxu0 0
        %1598 = vmatpush1.bf16.msra.mxu0 %v1589
        %1599 = vmatprep.subr.bf16.mxu0 0
        %1600 = vmatpush1.bf16.msra.mxu0 0
        %1601 = vmatprep.subr.bf16.mxu0 0
        %1602 = vmatpush1.bf16.msra.mxu0 0
        %1603 = vmatprep.subr.bf16.mxu0 0
        %1604 = vmatpush1.bf16.msra.mxu0 0
        %1605 = vmatprep.subr.bf16.mxu0 0
        %1606 = vmatpush1.bf16.msra.mxu0 0
        %1607 = vmatprep.subr.bf16.mxu0 0
        %1608 = vmatpush1.bf16.msra.mxu0 0
        %1609 = vmatprep.subr.bf16.mxu0 0
        %1610 = vmatpush1.bf16.msra.mxu0 0
        %1611 = vmatprep.subr.bf16.mxu0 0
        %1612 = vmatpush1.bf16.msra.mxu0 0
        %1613 = vmatprep.subr.bf16.mxu0 0
        %1614 = vmatpush1.bf16.msra.mxu0 0
        %1615 = vmatprep.subr.bf16.mxu0 0
        %1616 = vmatpush1.bf16.msra.mxu0 0
        %1617 = vmatprep.subr.bf16.mxu0 0
        %1618 = vmatpush1.bf16.msra.mxu0 0
        %1619 = vmatprep.subr.bf16.mxu0 0
        %1620 = vmatpush1.bf16.msra.mxu0 0
        %1621 = vmatprep.subr.bf16.mxu0 0
        %1622 = vmatpush1.bf16.msra.mxu0 0
        %1623 = vmatprep.subr.bf16.mxu0 0
        %1624 = vmatpush1.bf16.msra.mxu0 0
        %1625 = vmatprep.subr.bf16.mxu0 0
        %1626 = vmatpush1.bf16.msra.mxu0 0
        %1627 = vmatprep.mubr.bf16.mxu0 0
        %1628 = vmatmul.mubr.bf16.gmra.mrb[0].mxu0 %v1593
        %v1629 = vpop.f32.mrb[0].mxu0
        %v1630 = vadd.f32 %v1578, %v1629
        %v1631 = vpop.f32.mrb[0].mxu0
        %v1632 = vpop.f32.mrb[0].mxu0
        %v1633 = vadd.f32 %v1578, %v1632
        %v1634 = vpop.f32.mrb[0].mxu0
        %1635 = vdwg.mxu0
        %v1636 = vadd.f32 %v1630, %v976
        %v1637 = vadd.f32 %v1633, %v977
        %v1638 = vld [vmem:[%s866] sm:$0x1]
        %v1639 = vld [vmem:[%s869] sm:$0x1]
        %v1640 = vsel %vm1002, %v1636, 0.0
        %1641 = vadd.xlane.f32.xlu0 %v1640
        %v1642 = vpop.xlane.xlu0 %1641
        %v1643 = vsel %vm1002, %v1637, 0.0
        %1644 = vadd.xlane.f32.xlu0 %v1643
        %v1645 = vpop.xlane.xlu0 %1644
        %v1646 = vrcp.pop 32.0
        %v1647 = vmul.f32 %v1642, %v1646
        %v1648 = vmul.f32 %v1645, %v1646
        %v1649 = vsub.f32 %v1636, %v1647
        %v1650 = vsub.f32 %v1637, %v1648
        %v1651 = vmul.f32 %v1649, %v1649
        %v1652 = vmul.f32 %v1650, %v1650
        %v1653 = vsel %vm1002, %v1651, 0.0
        %1654 = vadd.xlane.f32.xlu0 %v1653
        %v1655 = vpop.xlane.xlu0 %1654
        %v1656 = vsel %vm1002, %v1652, 0.0
        %1657 = vadd.xlane.f32.xlu0 %v1656
        %v1658 = vpop.xlane.xlu0 %1657
        %v1659 = vmul.f32 %v1655, %v1646
        %v1660 = vmul.f32 %v1658, %v1646
        %v1661 = vadd.f32 %v1659, 1e-12
        %v1662 = vadd.f32 %v1660, 1e-12
        %v1663 = vrsqrt.pop %v1661
        %v1664 = vrsqrt.pop %v1662
        %v1665 = vmul.f32 %v1649, %v1663
        %v1666 = vmul.f32 %v1650, %v1664
        %v1668 = vlaneseq
        %v1669 = vshrl.u32 %v1668, 7
        %v1670 = vsub.s32 0, %v1669
        %v1671 = vrot.slane %v1638, %v1670
        %v1673 = vmul.f32 %v1665, %v1671
        %v1674 = vmul.f32 %v1666, %v1671
        %v1676 = vlaneseq
        %v1677 = vshrl.u32 %v1676, 7
        %v1678 = vsub.s32 0, %v1677
        %v1679 = vrot.slane %v1639, %v1678
        %v1681 = vadd.f32 %v1673, %v1679
        %v1682 = vadd.f32 %v1674, %v1679
        %v1683 = vpack.c.bf16 %v1682, %v1681
        %v1684 = vld [vmem:[%s874] sm:$0xf]
        %v1685 = vld [vmem:[%s874 + $0x4] sm:$0xf]
        %v1686 = vld [vmem:[%s874 + $0x8] sm:$0xf]
        %v1687 = vld [vmem:[%s874 + $0xc] sm:$0xf]
        %v1688 = vld [vmem:[%s877] sm:$0x1]
        %v1690 = vlaneseq
        %v1691 = vshrl.u32 %v1690, 7
        %v1692 = vsub.s32 0, %v1691
        %v1693 = vrot.slane %v1688, %v1692
        %v1699 = vunpack.c.l.b16 %v1684
        %v1700 = vunpack.c.l.b16 %v1685
        %v1701 = vunpack.c.l.b16 %v1686
        %v1702 = vunpack.c.l.b16 %v1687
        %v1703 = vpack.c.b16 %v1700, %v1699
        %v1704 = vpack.c.b16 %v1702, %v1701
        %v1708 = vsel %vm1002, %v1683, 0
        %1710 = vmatprep.subr.bf16.mxu0 0
        %1711 = vmatpush1.bf16.msra.mxu0 %v1703
        %1712 = vmatprep.subr.bf16.mxu0 0
        %1713 = vmatpush1.bf16.msra.mxu0 %v1704
        %1714 = vmatprep.subr.bf16.mxu0 0
        %1715 = vmatpush1.bf16.msra.mxu0 0
        %1716 = vmatprep.subr.bf16.mxu0 0
        %1717 = vmatpush1.bf16.msra.mxu0 0
        %1718 = vmatprep.subr.bf16.mxu0 0
        %1719 = vmatpush1.bf16.msra.mxu0 0
        %1720 = vmatprep.subr.bf16.mxu0 0
        %1721 = vmatpush1.bf16.msra.mxu0 0
        %1722 = vmatprep.subr.bf16.mxu0 0
        %1723 = vmatpush1.bf16.msra.mxu0 0
        %1724 = vmatprep.subr.bf16.mxu0 0
        %1725 = vmatpush1.bf16.msra.mxu0 0
        %1726 = vmatprep.subr.bf16.mxu0 0
        %1727 = vmatpush1.bf16.msra.mxu0 0
        %1728 = vmatprep.subr.bf16.mxu0 0
        %1729 = vmatpush1.bf16.msra.mxu0 0
        %1730 = vmatprep.subr.bf16.mxu0 0
        %1731 = vmatpush1.bf16.msra.mxu0 0
        %1732 = vmatprep.subr.bf16.mxu0 0
        %1733 = vmatpush1.bf16.msra.mxu0 0
        %1734 = vmatprep.subr.bf16.mxu0 0
        %1735 = vmatpush1.bf16.msra.mxu0 0
        %1736 = vmatprep.subr.bf16.mxu0 0
        %1737 = vmatpush1.bf16.msra.mxu0 0
        %1738 = vmatprep.subr.bf16.mxu0 0
        %1739 = vmatpush1.bf16.msra.mxu0 0
        %1740 = vmatprep.subr.bf16.mxu0 0
        %1741 = vmatpush1.bf16.msra.mxu0 0
        %1742 = vmatprep.mubr.bf16.mxu0 0
        %1743 = vmatmul.mubr.bf16.gmra.mrb[0].mxu0 %v1708
        %v1744 = vpop.f32.mrb[0].mxu0
        %v1745 = vadd.f32 %v1693, %v1744
        %v1746 = vpop.f32.mrb[0].mxu0
        %v1747 = vpop.f32.mrb[0].mxu0
        %v1748 = vadd.f32 %v1693, %v1747
        %v1749 = vpop.f32.mrb[0].mxu0
        %1750 = vdwg.mxu0
        %v1751 = vmul.f32 %v1745, 0.5
        %v1752 = vmul.f32 %v1748, 0.5
        %v1753 = vmul.f32 %v1745, 0.044715
        %v1754 = vmul.f32 %v1748, 0.044715
        %v1755 = vmul.f32 %v1753, %v1745
        %v1756 = vmul.f32 %v1754, %v1748
        %v1757 = vmul.f32 %v1755, %v1745
        %v1758 = vmul.f32 %v1756, %v1748
        %v1759 = vadd.f32 %v1745, %v1757
        %v1760 = vadd.f32 %v1748, %v1758
        %v1761 = vmul.f32 %v1759, 0.7978846
        %v1762 = vmul.f32 %v1760, 0.7978846
        %v1763 = vtanh.pop %v1761
        %v1764 = vtanh.pop %v1762
        %v1765 = vadd.f32 %v1763, 1.0
        %v1766 = vadd.f32 %v1764, 1.0
        %v1767 = vmul.f32 %v1751, %v1765
        %v1768 = vmul.f32 %v1752, %v1766
        %v1769 = vpack.c.bf16 %v1768, %v1767
        %v1770 = vld [vmem:[%s882] sm:$0xf]
        %v1771 = vld [vmem:[%s882 + $0x4] sm:$0xf]
        %v1772 = vld [vmem:[%s882 + $0x8] sm:$0xf]
        %v1773 = vld [vmem:[%s882 + $0xc] sm:$0xf]
        %v1774 = vld [vmem:[%s882 + $0x10] sm:$0xf]
        %v1775 = vld [vmem:[%s882 + $0x14] sm:$0xf]
        %v1776 = vld [vmem:[%s882 + $0x18] sm:$0xf]
        %v1777 = vld [vmem:[%s882 + $0x1c] sm:$0xf]
        %v1778 = vld [vmem:[%s885] sm:$0x1]
        %v1780 = vlaneseq
        %v1781 = vshrl.u32 %v1780, 7
        %v1782 = vsub.s32 0, %v1781
        %v1783 = vrot.slane %v1778, %v1782
        %v1793 = vunpack.c.l.b16 %v1770
        %v1794 = vunpack.c.l.b16 %v1771
        %v1795 = vunpack.c.l.b16 %v1772
        %v1796 = vunpack.c.l.b16 %v1773
        %v1797 = vunpack.c.l.b16 %v1774
        %v1798 = vunpack.c.l.b16 %v1775
        %v1799 = vunpack.c.l.b16 %v1776
        %v1800 = vunpack.c.l.b16 %v1777
        %v1801 = vpack.c.b16 %v1794, %v1793
        %v1802 = vpack.c.b16 %v1796, %v1795
        %v1803 = vpack.c.b16 %v1798, %v1797
        %v1804 = vpack.c.b16 %v1800, %v1799
        %vm1809 = vcmask 523264
        %v1811 = vsel %vm1809, %v1769, 0
        %1813 = vmatprep.subr.bf16.mxu0 0
        %1814 = vmatpush1.bf16.msra.mxu0 %v1801
        %1815 = vmatprep.subr.bf16.mxu0 0
        %1816 = vmatpush1.bf16.msra.mxu0 %v1802
        %1817 = vmatprep.subr.bf16.mxu0 0
        %1818 = vmatpush1.bf16.msra.mxu0 %v1803
        %1819 = vmatprep.subr.bf16.mxu0 0
        %1820 = vmatpush1.bf16.msra.mxu0 %v1804
        %1821 = vmatprep.subr.bf16.mxu0 0
        %1822 = vmatpush1.bf16.msra.mxu0 0
        %1823 = vmatprep.subr.bf16.mxu0 0
        %1824 = vmatpush1.bf16.msra.mxu0 0
        %1825 = vmatprep.subr.bf16.mxu0 0
        %1826 = vmatpush1.bf16.msra.mxu0 0
        %1827 = vmatprep.subr.bf16.mxu0 0
        %1828 = vmatpush1.bf16.msra.mxu0 0
        %1829 = vmatprep.subr.bf16.mxu0 0
        %1830 = vmatpush1.bf16.msra.mxu0 0
        %1831 = vmatprep.subr.bf16.mxu0 0
        %1832 = vmatpush1.bf16.msra.mxu0 0
        %1833 = vmatprep.subr.bf16.mxu0 0
        %1834 = vmatpush1.bf16.msra.mxu0 0
        %1835 = vmatprep.subr.bf16.mxu0 0
        %1836 = vmatpush1.bf16.msra.mxu0 0
        %1837 = vmatprep.subr.bf16.mxu0 0
        %1838 = vmatpush1.bf16.msra.mxu0 0
        %1839 = vmatprep.subr.bf16.mxu0 0
        %1840 = vmatpush1.bf16.msra.mxu0 0
        %1841 = vmatprep.subr.bf16.mxu0 0
        %1842 = vmatpush1.bf16.msra.mxu0 0
        %1843 = vmatprep.subr.bf16.mxu0 0
        %1844 = vmatpush1.bf16.msra.mxu0 0
        %1845 = vmatprep.mubr.bf16.mxu0 0
        %1846 = vmatmul.mubr.bf16.gmra.mrb[0].mxu0 %v1811
        %v1847 = vpop.f32.mrb[0].mxu0
        %v1848 = vadd.f32 %v1783, %v1847
        %v1849 = vpop.f32.mrb[0].mxu0
        %v1850 = vpop.f32.mrb[0].mxu0
        %v1851 = vadd.f32 %v1783, %v1850
        %v1852 = vpop.f32.mrb[0].mxu0
        %1853 = vdwg.mxu0
        %v1854 = vadd.f32 %v1848, %v1681
        %v1855 = vadd.f32 %v1851, %v1682
        %v1856 = vld [vmem:[%s888] sm:$0x1]
        %v1857 = vld [vmem:[%s891] sm:$0x1]
        %v1858 = vsel %vm1002, %v1854, 0.0
        %1859 = vadd.xlane.f32.xlu0 %v1858
        %v1860 = vpop.xlane.xlu0 %1859
        %v1861 = vsel %vm1002, %v1855, 0.0
        %1862 = vadd.xlane.f32.xlu0 %v1861
        %v1863 = vpop.xlane.xlu0 %1862
        %v1864 = vmul.f32 %v1860, %v1646
        %v1865 = vmul.f32 %v1863, %v1646
        %v1866 = vsub.f32 %v1854, %v1864
        %v1867 = vsub.f32 %v1855, %v1865
        %v1868 = vmul.f32 %v1866, %v1866
        %v1869 = vmul.f32 %v1867, %v1867
        %v1870 = vsel %vm1002, %v1868, 0.0
        %1871 = vadd.xlane.f32.xlu0 %v1870
        %v1872 = vpop.xlane.xlu0 %1871
        %v1873 = vsel %vm1002, %v1869, 0.0
        %1874 = vadd.xlane.f32.xlu0 %v1873
        %v1875 = vpop.xlane.xlu0 %1874
        %v1876 = vmul.f32 %v1872, %v1646
        %v1877 = vmul.f32 %v1875, %v1646
        %v1878 = vadd.f32 %v1876, 1e-12
        %v1879 = vadd.f32 %v1877, 1e-12
        %v1880 = vrsqrt.pop %v1878
        %v1881 = vrsqrt.pop %v1879
        %v1882 = vmul.f32 %v1866, %v1880
        %v1883 = vmul.f32 %v1867, %v1881
        %v1885 = vlaneseq
        %v1886 = vshrl.u32 %v1885, 7
        %v1887 = vsub.s32 0, %v1886
        %v1888 = vrot.slane %v1856, %v1887
        %v1890 = vmul.f32 %v1882, %v1888
        %v1891 = vmul.f32 %v1883, %v1888
        %v1893 = vlaneseq
        %v1894 = vshrl.u32 %v1893, 7
        %v1895 = vsub.s32 0, %v1894
        %v1896 = vrot.slane %v1857, %v1895
        %v1898 = vadd.f32 %v1890, %v1896
        %v1899 = vadd.f32 %v1891, %v1896
        %1900 = vst.msk [vmem:[#allocation3] sm:$0xff] %vm1002, %v1898
        %1901 = vst.msk [vmem:[#allocation3 + $0x8] sm:$0xff] %vm1002, %v1899
        %p1902 = scmp.eq.s32.totalorder %s38, 1
        // Predicated region
        $region113: #{student_bert_classifier_forward.1} parent=107 // pred_check
          %p1903 = pneg %p1902
        $region114: #{student_bert_classifier_forward.1} parent=107 // pred_check_branch
          %1905 = sbr.rel (%p1903) target = $region116
        $region115: #{student_bert_classifier_forward.1} parent=107 // pred_region
          %v1907 = vrot.slane %v1899, 7
          %vm1909 = vcmask 1040384
          %v1910 = vsel %vm1909, %v1898, %v1907
          %v1911 = vpack.c.bf16 %v1910, %v1910
          %v1912 = vld [vmem:[%s18] sm:$0xf]
          %v1913 = vld [vmem:[%s18 + $0x4] sm:$0xf]
          %v1914 = vld [vmem:[%s18 + $0x8] sm:$0xf]
          %v1915 = vld [vmem:[%s18 + $0xc] sm:$0xf]
          %v1916 = vld [vmem:[%s19] sm:$0x1]
          %v1918 = vlaneseq
          %v1919 = vshrl.u32 %v1918, 7
          %v1920 = vsub.s32 0, %v1919
          %v1921 = vrot.slane %v1916, %v1920
          %v1927 = vunpack.c.l.b16 %v1912
          %v1928 = vunpack.c.l.b16 %v1913
          %v1929 = vunpack.c.l.b16 %v1914
          %v1930 = vunpack.c.l.b16 %v1915
          %v1931 = vpack.c.b16 %v1928, %v1927
          %v1932 = vpack.c.b16 %v1930, %v1929
          %v1936 = vsel %vm1002, %v1911, 0
          %1938 = vmatprep.subr.bf16.mxu0 0
          %1939 = vmatpush1.bf16.msra.mxu0 %v1931
          %1940 = vmatprep.subr.bf16.mxu0 0
          %1941 = vmatpush1.bf16.msra.mxu0 %v1932
          %1942 = vmatprep.subr.bf16.mxu0 0
          %1943 = vmatpush1.bf16.msra.mxu0 0
          %1944 = vmatprep.subr.bf16.mxu0 0
          %1945 = vmatpush1.bf16.msra.mxu0 0
          %1946 = vmatprep.subr.bf16.mxu0 0
          %1947 = vmatpush1.bf16.msra.mxu0 0
          %1948 = vmatprep.subr.bf16.mxu0 0
          %1949 = vmatpush1.bf16.msra.mxu0 0
          %1950 = vmatprep.subr.bf16.mxu0 0
          %1951 = vmatpush1.bf16.msra.mxu0 0
          %1952 = vmatprep.subr.bf16.mxu0 0
          %1953 = vmatpush1.bf16.msra.mxu0 0
          %1954 = vmatprep.subr.bf16.mxu0 0
          %1955 = vmatpush1.bf16.msra.mxu0 0
          %1956 = vmatprep.subr.bf16.mxu0 0
          %1957 = vmatpush1.bf16.msra.mxu0 0
          %1958 = vmatprep.subr.bf16.mxu0 0
          %1959 = vmatpush1.bf16.msra.mxu0 0
          %1960 = vmatprep.subr.bf16.mxu0 0
          %1961 = vmatpush1.bf16.msra.mxu0 0
          %1962 = vmatprep.subr.bf16.mxu0 0
          %1963 = vmatpush1.bf16.msra.mxu0 0
          %1964 = vmatprep.subr.bf16.mxu0 0
          %1965 = vmatpush1.bf16.msra.mxu0 0
          %1966 = vmatprep.subr.bf16.mxu0 0
          %1967 = vmatpush1.bf16.msra.mxu0 0
          %1968 = vmatprep.subr.bf16.mxu0 0
          %1969 = vmatpush1.bf16.msra.mxu0 0
          %1970 = vmatprep.mubr.bf16.mxu0 0
          %1971 = vmatmul.mubr.bf16.gmra.mrb[0].mxu0 %v1936
          %v1972 = vpop.f32.mrb[0].mxu0
          %v1973 = vadd.f32 %v1921, %v1972
          %v1974 = vpop.f32.mrb[0].mxu0
          %v1975 = vpop.f32.mrb[0].mxu0
          %v1976 = vpop.f32.mrb[0].mxu0
          %1977 = vdwg.mxu0
          %v1978 = vtanh.pop %v1973
          %vm1979 = vcmask 254976
          %1980 = vst.msk [vmem:[#allocation5] sm:$0x3] %vm1979, %v1978
          %v1981 = vpack.c.bf16 %v1978, %v1978
          %v1982 = vld [vmem:[%s20] sm:$0xf]
          %v1983 = vld [vmem:[%s20 + $0x4] sm:$0xf]
          %v1984 = vld [vmem:[%s20 + $0x8] sm:$0xf]
          %v1985 = vld [vmem:[%s20 + $0xc] sm:$0xf]
          %v1986 = vld [vmem:[%s21] sm:$0x1]
          %v1988 = vlaneseq
          %v1989 = vshrl.u32 %v1988, 7
          %v1990 = vsub.s32 0, %v1989
          %v1991 = vrot.slane %v1986, %v1990
          %v1997 = vunpack.c.l.b16 %v1982
          %v1998 = vunpack.c.l.b16 %v1983
          %v1999 = vunpack.c.l.b16 %v1984
          %v2000 = vunpack.c.l.b16 %v1985
          %v2001 = vpack.c.b16 %v1998, %v1997
          %v2002 = vpack.c.b16 %v2000, %v1999
          %v2006 = vsel %vm1002, %v1981, 0
          %2008 = vmatprep.subr.bf16.mxu0 0
          %2009 = vmatpush1.bf16.msra.mxu0 %v2001
          %2010 = vmatprep.subr.bf16.mxu0 0
          %2011 = vmatpush1.bf16.msra.mxu0 %v2002
          %2012 = vmatprep.subr.bf16.mxu0 0
          %2013 = vmatpush1.bf16.msra.mxu0 0
          %2014 = vmatprep.subr.bf16.mxu0 0
          %2015 = vmatpush1.bf16.msra.mxu0 0
          %2016 = vmatprep.subr.bf16.mxu0 0
          %2017 = vmatpush1.bf16.msra.mxu0 0
          %2018 = vmatprep.subr.bf16.mxu0 0
          %2019 = vmatpush1.bf16.msra.mxu0 0
          %2020 = vmatprep.subr.bf16.mxu0 0
          %2021 = vmatpush1.bf16.msra.mxu0 0
          %2022 = vmatprep.subr.bf16.mxu0 0
          %2023 = vmatpush1.bf16.msra.mxu0 0
          %2024 = vmatprep.subr.bf16.mxu0 0
          %2025 = vmatpush1.bf16.msra.mxu0 0
          %2026 = vmatprep.subr.bf16.mxu0 0
          %2027 = vmatpush1.bf16.msra.mxu0 0
          %2028 = vmatprep.subr.bf16.mxu0 0
          %2029 = vmatpush1.bf16.msra.mxu0 0
          %2030 = vmatprep.subr.bf16.mxu0 0
          %2031 = vmatpush1.bf16.msra.mxu0 0
          %2032 = vmatprep.subr.bf16.mxu0 0
          %2033 = vmatpush1.bf16.msra.mxu0 0
          %2034 = vmatprep.subr.bf16.mxu0 0
          %2035 = vmatpush1.bf16.msra.mxu0 0
          %2036 = vmatprep.subr.bf16.mxu0 0
          %2037 = vmatpush1.bf16.msra.mxu0 0
          %2038 = vmatprep.subr.bf16.mxu0 0
          %2039 = vmatpush1.bf16.msra.mxu0 0
          %2040 = vmatprep.mubr.bf16.mxu0 0
          %2041 = vmatmul.mubr.bf16.gmra.mrb[0].mxu0 %v2006
          %v2042 = vpop.f32.mrb[0].mxu0
          %v2043 = vadd.f32 %v1991, %v2042
          %v2044 = vpop.f32.mrb[0].mxu0
          %v2045 = vpop.f32.mrb[0].mxu0
          %v2046 = vpop.f32.mrb[0].mxu0
          %2047 = vdwg.mxu0
          %2048 = vst [vmem:[#allocation7] sm:$0x3] %v2043
        $region116: #{student_bert_classifier_forward.1} parent=107 // pred_fallthru
          _
        // Predicated region
        $region117: #{student_bert_classifier_forward.1} parent=107 // pred_check
          %p2049 = pneg %p573
        $region118: #{student_bert_classifier_forward.1} parent=107 // pred_check_branch
          %2051 = sbr.rel (%p2049) target = $region120
        $region119: #{student_bert_classifier_forward.1} parent=107 // pred_region
          %s2053 = ssub.s32 256, 256
          %2054 = vsyncadd [#allocation4], %s2053
          %s2055 = sshll.u32 [#allocation3], 4
          %s2056 = int_to_ptr.vmem [resolvable:$true] %s2055
          %2061 = dma.vmem_to_hbm [thread:$0]  %s2056, 256, %s22, [#allocation4], 128, 128, 8
        $region120: #{student_bert_classifier_forward.1} parent=107 // pred_fallthru
          _
        // Predicated region
        $region121: #{student_bert_classifier_forward.1} parent=107 // pred_check
          %p2062 = pneg %p594
        $region122: #{student_bert_classifier_forward.1} parent=107 // pred_check_branch
          %2064 = sbr.rel (%p2062) target = $region124
        $region123: #{student_bert_classifier_forward.1} parent=107 // pred_region
          %s2066 = ssub.s32 32, 32
          %2067 = vsyncadd [#allocation6], %s2066
          %s2069 = sshll.u32 [#allocation5], 4
          %s2070 = int_to_ptr.vmem [resolvable:$true] %s2069
          %2072 = dma.vmem_to_hbm [thread:$0]  %s2070, 32, %s23, [#allocation6]
        $region124: #{student_bert_classifier_forward.1} parent=107 // pred_fallthru
          _
        // Predicated region
        $region125: #{student_bert_classifier_forward.1} parent=107 // pred_check
          %p2073 = pneg %p615
        $region126: #{student_bert_classifier_forward.1} parent=107 // pred_check_branch
          %2075 = sbr.rel (%p2073) target = $region128
        $region127: #{student_bert_classifier_forward.1} parent=107 // pred_region
          %s2077 = ssub.s32 32, 32
          %2078 = vsyncadd [#allocation6], %s2077
          %s2080 = sshll.u32 [#allocation7], 4
          %s2081 = int_to_ptr.vmem [resolvable:$true] %s2080
          %2083 = dma.vmem_to_hbm [thread:$0]  %s2081, 32, %s24, [#allocation6]
        $region128: #{student_bert_classifier_forward.1} parent=107 // pred_fallthru
          _
        // Predicated region
        $region129: #{student_bert_classifier_forward.1} parent=107 // pred_check
          %p2084 = pneg %p573
        $region130: #{student_bert_classifier_forward.1} parent=107 // pred_check_branch
          %2086 = sbr.rel (%p2084) target = $region132
        $region131: #{student_bert_classifier_forward.1} parent=107 // pred_region
          %2087 = dma.done [#allocation4], 256
        $region132: #{student_bert_classifier_forward.1} parent=107 // pred_fallthru
          _
        // Predicated region
        $region133: #{student_bert_classifier_forward.1} parent=107 // pred_check
          %p2088 = pneg %p594
        $region134: #{student_bert_classifier_forward.1} parent=107 // pred_check_branch
          %2090 = sbr.rel (%p2088) target = $region136
        $region135: #{student_bert_classifier_forward.1} parent=107 // pred_region
          %2091 = dma.done [#allocation6], 32
        $region136: #{student_bert_classifier_forward.1} parent=107 // pred_fallthru
          _
        // Predicated region
        $region137: #{student_bert_classifier_forward.1} parent=107 // pred_check
          %p2092 = pneg %p615
        $region138: #{student_bert_classifier_forward.1} parent=107 // pred_check_branch
          %2094 = sbr.rel (%p2092) target = $region140
        $region139: #{student_bert_classifier_forward.1} parent=107 // pred_region
          %2095 = dma.done [#allocation6], 32
        $region140: #{student_bert_classifier_forward.1} parent=107 // pred_fallthru
          _
      $region108: #{student_bert_classifier_forward.1} parent=5 // pred_fallthru
        _
      %p2096 = scmp.le.s32.totalorder 2, %s33
      // Predicated region
      $region141: #{student_bert_classifier_forward.1} parent=5 // pred_check
        %p2097 = pneg %p2096
      $region142: #{student_bert_classifier_forward.1} parent=5 // pred_check_branch
        %2099 = sbr.rel (%p2097) target = $region144
      $region143: #{student_bert_classifier_forward.1} parent=5 // pred_region
        %s2100 = ssub.s32 %s33, 2
      $region144: #{student_bert_classifier_forward.1} parent=5 // pred_fallthru
        _
    $region6: #{student_bert_classifier_forward.1} parent=1 // loop_footer
      %s37 = sadd.s32 1, %s33
    $region7: #{student_bert_classifier_forward.1} parent=1 // loop_footer_branch
      %32 = sbr.rel target = $region3
    $region8: #{student_bert_classifier_forward.1} parent=1 // loop_exit
      _
    %2101 = vsyncpa [#allocation4], 1
    %s2102 = scalar_lea.sflag [#allocation4], 1
    %2103 = vsyncpa %s2102, 1
    %2104 = vsyncpa [#allocation6], 1

</llo_original>
